<compile_context>
chip_gen: v7x
topology: tpu7x:2x2x1
jax: 0.10.0
libtpu: 0.0.40
codegen_flags: <defaults>
</compile_context>

<pallas_src>
import jax
import jax.numpy as jnp
from jax.experimental import pallas as pl
from jax.experimental.pallas import tpu as pltpu


# ------------------------- one-time parameter packing -------------------------
def pack_gc_net_params(params):
    """Pack all weights into one zero-padded [rows, LW] slab (done once, reused)."""
    wx = params["wx"]            # [dim_x, dim_emb_x]
    w0 = params["w0"]            # [dim_x + dim_y, H]   (no bias)
    wf = params["wf"]            # [H, dim_lat]
    bf = params["bf"]            # [1, dim_lat]
    hidden = params["hidden"]    # [wh_0, bh_0, wh_1, bh_1, ...]

    dim_x, dim_emb_x = wx.shape
    H = w0.shape[1]
    dim_lat = wf.shape[1]
    num_h_lat = len(hidden) // 2
    LW = -(-max(dim_emb_x, H, dim_lat, 128) // 128) * 128   # lane width (mult of 128)

    blocks, offsets = [], {}

    def add(name, w):
        r, c = w.shape
        rp = -(-r // 8) * 8                                  # sublane-align each block
        offsets[name] = (sum(b.shape[0] for b in blocks), r)
        blocks.append(jnp.pad(w.astype(jnp.float32), ((0, rp - r), (0, LW - c))))

    add("wx", wx)
    add("w0x", w0[:dim_x])       # split first trans_net layer: x part
    add("w0y", w0[dim_x:])       #                              y part
    for i in range(num_h_lat):
        # pad rows to LW so the kernel can contract the LW-lane activations directly
        add(f"wh{i}", jnp.pad(hidden[2 * i], ((0, LW - H), (0, 0))))
        add(f"bh{i}", hidden[2 * i + 1])
    add("wf", jnp.pad(wf, ((0, LW - H), (0, 0))))
    add("bf", bf)

    return {
        "slab": jnp.concatenate(blocks, axis=0),             # [rows, LW] f32
        "offsets": offsets,
        "beta": params["beta"].astype(jnp.float32),          # (1,), SMEM scalar input
        "num_h_lat": num_h_lat,
        "dim_lat": dim_lat,
        "lane_width": LW,
    }


# --------------------------------- kernel -------------------------------------
def make_gc_net_kernel(offsets, num_h_lat, B, Nc, Nt, LW):
    S = Nc + Nt

    def l2n(x):
        # torch.norm(p=2, dim=-1, keepdim=True).detach() then div (no eps, as in torch)
        return x * jax.lax.rsqrt(jnp.sum(x * x, axis=-1, keepdims=True))

    def kernel(beta_ref, xc_ref, xt_ref, yc_ref, w_ref,
               c_agg_ref, c2t_ref, t_agg_ref):
        def wload(name):
            off, rows = offsets[name]
            return w_ref[off:off + rows, :]                  # static slice of the slab

        beta = beta_ref[0]
        wx, w0x, w0y = wload("wx"), wload("w0x"), wload("w0y")
        wf, bf = wload("wf"), wload("bf")

        xc = xc_ref[...]                                     # [B*Nc, dim_x]
        xt = xt_ref[...]                                     # [B*Nt, dim_x]

        # ---- interleave context/target rows per batch (tiny VMEM copy, 8-aligned
        #      offsets) so each batch's [ec ; et] is one contiguous slice -> a single
        #      fused score matmul + a single softmax per batch.
        pieces = []
        for b in range(B):
            pieces.append(xc[b * Nc:(b + 1) * Nc])
            pieces.append(xt[b * Nt:(b + 1) * Nt])
        x_int = jnp.concatenate(pieces, axis=0)              # [B*S, dim_x]

        # ---- fc_x + detached L2 norm: one matmul for all context+target rows
        emb = jnp.dot(x_int, wx, preferred_element_type=jnp.float32)   # [B*S, LW]
        emb = l2n(emb)

        # ---- trans_net MLP, batch-flattened; first layer split (no concat input)
        h = (jnp.dot(xc, w0x, preferred_element_type=jnp.float32)
             + jnp.dot(yc_ref[...], w0y, preferred_element_type=jnp.float32))
        h = jnp.maximum(h, 0.0)
        for i in range(num_h_lat):
            wh, bh = wload(f"wh{i}"), wload(f"bh{i}")
            h = jnp.maximum(jnp.dot(h, wh, preferred_element_type=jnp.float32) + bh, 0.0)
        emb_ctx = jnp.dot(h, wf, preferred_element_type=jnp.float32) + bf   # [B*Nc, LW]

        # ---- per-batch fused attention + message passing, direct ref stores
        for b in range(B):
            e_b = emb[b * S:(b + 1) * S]                     # [S, LW] (rows :Nc = ec)
            ec = e_b[:Nc]                                    # [Nc, LW]
            scores = beta * jax.lax.dot_general(
                e_b, ec, (((1,), (1,)), ((), ())),
                preferred_element_type=jnp.float32)          # [S, Nc]

            m = jnp.max(scores, axis=-1, keepdims=True)
            p = jnp.exp(scores - m)
            p = p * pl.reciprocal(jnp.sum(p, axis=-1, keepdims=True), approx=True)
            c_n, t_n = p[:Nc], p[Nc:]                        # [Nc,Nc], [Nt,Nc]

            emb_b = emb_ctx[b * Nc:(b + 1) * Nc]             # [Nc, LW]
            c_agg = jnp.dot(c_n, emb_b, preferred_element_type=jnp.float32)   # [Nc, LW]
            # mean (1/Nc) factors cancel exactly under the L2 normalization below
            c2t = l2n(jnp.sum(c_agg, axis=0, keepdims=True))                  # [1,  LW]
            t_agg = l2n(jnp.dot(t_n, c_agg, preferred_element_type=jnp.float32))  # [Nt, LW]

            c_agg_ref[b] = c_agg
            c2t_ref[b] = jnp.broadcast_to(c2t, (Nt, LW))     # emitted pre-broadcast
            t_agg_ref[b] = t_agg

    return kernel


# -------------------------------- wrapper --------------------------------------
def gc_net_forward(packed, x_context, x_target, y_context):
    B, Nc, dim_x = x_context.shape
    Nt = x_target.shape[1]
    dim_y = y_context.shape[2]
    dim_lat = packed["dim_lat"]
    LW = packed["lane_width"]
    slab = packed["slab"]

    # free reshapes only — no wrapper-side concatenations / HBM copies
    xc = x_context.reshape(B * Nc, dim_x)
    xt = x_target.reshape(B * Nt, dim_x)
    yc = y_context.reshape(B * Nc, dim_y)

    vmem = lambda: pl.BlockSpec(memory_space=pltpu.MemorySpace.VMEM)
    smem = pl.BlockSpec(memory_space=pltpu.MemorySpace.SMEM)

    out_shapes = (
        jax.ShapeDtypeStruct((B, Nc, LW), jnp.float32),      # c_message_aggregation
        jax.ShapeDtypeStruct((B, Nt, LW), jnp.float32),      # c2t (already broadcast)
        jax.ShapeDtypeStruct((B, Nt, LW), jnp.float32),      # t_message_aggregation
    )

    flops = 2 * (B * (Nc + Nt) * dim_x * LW                  # fc_x
                 + B * Nc * (dim_x + dim_y) * LW             # first trans layer
                 + packed["num_h_lat"] * B * Nc * LW * LW    # hidden layers
                 + B * Nc * LW * LW                          # final trans layer
                 + B * (Nc + Nt) * LW * Nc                   # fused scores
                 + B * Nc * Nc * LW                          # c message passing
                 + B * Nt * Nc * LW)                         # t message passing
    bytes_accessed = 4 * (xc.size + xt.size + yc.size + slab.size + 1
                          + B * Nc * LW + 2 * B * Nt * LW)
    cost = pl.CostEstimate(flops=int(flops),
                           transcendentals=int(B * (Nc + Nt) * Nc),
                           bytes_accessed=int(bytes_accessed))

    kernel = make_gc_net_kernel(packed["offsets"], packed["num_h_lat"], B, Nc, Nt, LW)
    c_agg_p, c2t_p, t_agg_p = pl.pallas_call(
        kernel,
        out_shape=out_shapes,
        in_specs=[smem, vmem(), vmem(), vmem(), vmem()],
        out_specs=(vmem(), vmem(), vmem()),
        cost_estimate=cost,
    )(packed["beta"], xc, xt, yc, slab)

    # only the lane padding is sliced off; shapes are already (B, N, .)
    return (c_agg_p[..., :dim_lat], c2t_p[..., :dim_lat], t_agg_p[..., :dim_lat])


# --------------------------- pure-JAX reference --------------------------------
def gc_net_reference(params, x_context, x_target, y_context):
    Nc = x_context.shape[1]
    Nt = x_target.shape[1]
    beta = params["beta"][0]
    num_h_lat = len(params["hidden"]) // 2

    def l2n(x):
        return x / jnp.sqrt(jnp.sum(x * x, axis=-1, keepdims=True))

    x_emb_c = l2n(x_context @ params["wx"])
    x_emb_t = l2n(x_target @ params["wx"])
    c_n = jax.nn.softmax(beta * jnp.einsum("bie,bje->bij", x_emb_c, x_emb_c), axis=-1)
    t_n = jax.nn.softmax(beta * jnp.einsum("bie,bje->bij", x_emb_t, x_emb_c), axis=-1)

    ctx = jnp.concatenate([x_context, y_context], axis=-1)
    h = jnp.maximum(ctx @ params["w0"], 0.0)
    for i in range(num_h_lat):
        h = jnp.maximum(h @ params["hidden"][2 * i] + params["hidden"][2 * i + 1], 0.0)
    emb = h @ params["wf"] + params["bf"]

    c_agg = jnp.einsum("bij,bjl->bil", c_n, emb)
    c2t = jnp.broadcast_to(jnp.mean(c_agg, axis=1, keepdims=True),
                           (c_agg.shape[0], Nt, c_agg.shape[2]))
    t_agg = jnp.einsum("bij,bjl->bil", t_n, c_agg) / Nc
    return c_agg, l2n(c2t), l2n(t_agg)


# --------------------------------- main ----------------------------------------
if __name__ == "__main__":
    # module hyper-params (GC_Net(dim_x, dim_y, dim_emb_x, dim_lat, dim_h_lat, num_h_lat))
    B, Nc, Nt = 2, 16, 8
    dim_x, dim_y = 8, 8
    dim_emb_x, dim_lat, dim_h_lat, num_h_lat = 32, 32, 32, 1

    key = jax.random.PRNGKey(0)
    ks = jax.random.split(key, 16)

    # deterministic parameter init (weights stored pre-transposed: [in, out])
    params = {
        "beta": jnp.ones((1,), jnp.float32),   # Variable(torch.ones(1)), requires_grad=False
        "wx":  0.1 * jax.random.normal(ks[0], (dim_x, dim_emb_x), jnp.float32),
        "w0":  0.1 * jax.random.normal(ks[1], (dim_x + dim_y, dim_h_lat), jnp.float32),
        "hidden": [],
        "wf":  0.1 * jax.random.normal(ks[3], (dim_h_lat, dim_lat), jnp.float32),
        "bf":  0.1 * jax.random.normal(ks[4], (1, dim_lat), jnp.float32),
    }
    for i in range(num_h_lat):
        params["hidden"].append(
            0.1 * jax.random.normal(ks[5 + 2 * i], (dim_h_lat, dim_h_lat), jnp.float32))
        params["hidden"].append(
            0.1 * jax.random.normal(ks[6 + 2 * i], (1, dim_h_lat), jnp.float32))

    x_context = jax.random.normal(ks[10], (B, Nc, dim_x), jnp.float32)
    x_target = jax.random.normal(ks[11], (B, Nt, dim_x), jnp.float32)
    y_context = jax.random.normal(ks[12], (B, Nc, dim_y), jnp.float32)

    # weights are packed once (at "init") and reused for every forward call
    packed = pack_gc_net_params(params)

    outs = gc_net_forward(packed, x_context, x_target, y_context)
    outs = jax.block_until_ready(outs)

    refs = gc_net_reference(params, x_context, x_target, y_context)
    # tolerance covers the EUP approximate reciprocal used for the softmax denominator
    tol = 5e-3
    for o, r in zip(outs, refs):
        assert o.shape == r.shape and o.dtype == r.dtype
        assert bool(jnp.max(jnp.abs(o - r)) < tol), "mismatch vs reference"

    print("KERNEL_OK")
</pallas_src>

<mosaic_0001>
module attributes {stable_mosaic.version = 11 : i64} {
  func.func @kernel(%arg0: memref<1xf32, #tpu.memory_space<smem>>, %arg1: memref<32x8xf32, #tpu.memory_space<vmem>>, %arg2: memref<16x8xf32, #tpu.memory_space<vmem>>, %arg3: memref<32x8xf32, #tpu.memory_space<vmem>>, %arg4: memref<296x128xf32, #tpu.memory_space<vmem>>, %arg5: memref<2x16x128xf32, #tpu.memory_space<vmem>>, %arg6: memref<2x8x128xf32, #tpu.memory_space<vmem>>, %arg7: memref<2x8x128xf32, #tpu.memory_space<vmem>>) attributes {dimension_semantics = [], scalar_prefetch = 0 : i64, scratch_operands = 0 : i64, tpu.core_type = #tpu.core_type<tc>} {
    %c0 = arith.constant 0 : index
    %0 = memref.load %arg0[%c0] : memref<1xf32, #tpu.memory_space<smem>>
    %c0_0 = arith.constant 0 : index
    %c0_1 = arith.constant 0 : index
    %1 = vector.load %arg4[%c0_0, %c0_1] : memref<296x128xf32, #tpu.memory_space<vmem>>, vector<8x128xf32>
    %c8 = arith.constant 8 : index
    %c0_2 = arith.constant 0 : index
    %2 = vector.load %arg4[%c8, %c0_2] : memref<296x128xf32, #tpu.memory_space<vmem>>, vector<8x128xf32>
    %c16 = arith.constant 16 : index
    %c0_3 = arith.constant 0 : index
    %3 = vector.load %arg4[%c16, %c0_3] : memref<296x128xf32, #tpu.memory_space<vmem>>, vector<8x128xf32>
    %c160 = arith.constant 160 : index
    %c0_4 = arith.constant 0 : index
    %4 = vector.load %arg4[%c160, %c0_4] : memref<296x128xf32, #tpu.memory_space<vmem>>, vector<128x128xf32>
    %c288 = arith.constant 288 : index
    %c0_5 = arith.constant 0 : index
    %5 = vector.load %arg4[%c288, %c0_5] : memref<296x128xf32, #tpu.memory_space<vmem>>, vector<1x128xf32>
    %c0_6 = arith.constant 0 : index
    %c0_7 = arith.constant 0 : index
    %6 = vector.load %arg1[%c0_6, %c0_7] : memref<32x8xf32, #tpu.memory_space<vmem>>, vector<32x8xf32>
    %c0_8 = arith.constant 0 : index
    %c0_9 = arith.constant 0 : index
    %7 = vector.load %arg2[%c0_8, %c0_9] : memref<16x8xf32, #tpu.memory_space<vmem>>, vector<16x8xf32>
    %8 = vector.extract_strided_slice %6 {offsets = [0, 0], sizes = [16, 8], strides = [1, 1]} : vector<32x8xf32> to vector<16x8xf32>
    %9 = vector.extract_strided_slice %7 {offsets = [0, 0], sizes = [8, 8], strides = [1, 1]} : vector<16x8xf32> to vector<8x8xf32>
    %10 = vector.extract_strided_slice %6 {offsets = [16, 0], sizes = [16, 8], strides = [1, 1]} : vector<32x8xf32> to vector<16x8xf32>
    %11 = vector.extract_strided_slice %7 {offsets = [8, 0], sizes = [8, 8], strides = [1, 1]} : vector<16x8xf32> to vector<8x8xf32>
    %12 = tpu.concatenate %8, %9, %10, %11 in 0 : vector<16x8xf32>, vector<8x8xf32>, vector<16x8xf32>, vector<8x8xf32> -> vector<48x8xf32>
    %cst = arith.constant dense<0.000000e+00> : vector<48x128xf32>
    %13 = tpu.matmul %12, %1, %cst {dimension_numbers = #tpu.dot_dimension_numbers<[1], [0], [0], [1], [0, 0, 1, 1], [], []>} : vector<48x8xf32>, vector<8x128xf32>, vector<48x128xf32> -> vector<48x128xf32>
    %14 = arith.mulf %13, %13 : vector<48x128xf32>
    %cst_10 = arith.constant dense<0.000000e+00> : vector<48xf32>
    %15 = vector.multi_reduction <add>, %14, %cst_10 [1] : vector<48x128xf32> to vector<48xf32>
    %16 = vector.shape_cast %15 : vector<48xf32> to vector<48x1xf32>
    %17 = math.rsqrt %16 : vector<48x1xf32>
    %18 = vector.broadcast %17 : vector<48x1xf32> to vector<48x128xf32>
    %19 = arith.mulf %13, %18 : vector<48x128xf32>
    %cst_11 = arith.constant dense<0.000000e+00> : vector<32x128xf32>
    %20 = tpu.matmul %6, %2, %cst_11 {dimension_numbers = #tpu.dot_dimension_numbers<[1], [0], [0], [1], [0, 0, 1, 1], [], []>} : vector<32x8xf32>, vector<8x128xf32>, vector<32x128xf32> -> vector<32x128xf32>
    %c0_12 = arith.constant 0 : index
    %c0_13 = arith.constant 0 : index
    %21 = vector.load %arg3[%c0_12, %c0_13] : memref<32x8xf32, #tpu.memory_space<vmem>>, vector<32x8xf32>
    %cst_14 = arith.constant dense<0.000000e+00> : vector<32x128xf32>
    %22 = tpu.matmul %21, %3, %cst_14 {dimension_numbers = #tpu.dot_dimension_numbers<[1], [0], [0], [1], [0, 0, 1, 1], [], []>} : vector<32x8xf32>, vector<8x128xf32>, vector<32x128xf32> -> vector<32x128xf32>
    %23 = arith.addf %20, %22 : vector<32x128xf32>
    %cst_15 = arith.constant 0.000000e+00 : f32
    %24 = vector.broadcast %cst_15 : f32 to vector<32x128xf32>
    %25 = arith.maximumf %23, %24 : vector<32x128xf32>
    %c24 = arith.constant 24 : index
    %c0_16 = arith.constant 0 : index
    %26 = vector.load %arg4[%c24, %c0_16] : memref<296x128xf32, #tpu.memory_space<vmem>>, vector<128x128xf32>
    %c152 = arith.constant 152 : index
    %c0_17 = arith.constant 0 : index
    %27 = vector.load %arg4[%c152, %c0_17] : memref<296x128xf32, #tpu.memory_space<vmem>>, vector<1x128xf32>
    %cst_18 = arith.constant dense<0.000000e+00> : vector<32x128xf32>
    %28 = tpu.matmul %25, %26, %cst_18 {dimension_numbers = #tpu.dot_dimension_numbers<[1], [0], [0], [1], [0, 0, 1, 1], [], []>} : vector<32x128xf32>, vector<128x128xf32>, vector<32x128xf32> -> vector<32x128xf32>
    %29 = vector.broadcast %27 : vector<1x128xf32> to vector<32x128xf32>
    %30 = arith.addf %28, %29 : vector<32x128xf32>
    %cst_19 = arith.constant 0.000000e+00 : f32
    %31 = vector.broadcast %cst_19 : f32 to vector<32x128xf32>
    %32 = arith.maximumf %30, %31 : vector<32x128xf32>
    %cst_20 = arith.constant dense<0.000000e+00> : vector<32x128xf32>
    %33 = tpu.matmul %32, %4, %cst_20 {dimension_numbers = #tpu.dot_dimension_numbers<[1], [0], [0], [1], [0, 0, 1, 1], [], []>} : vector<32x128xf32>, vector<128x128xf32>, vector<32x128xf32> -> vector<32x128xf32>
    %34 = vector.broadcast %5 : vector<1x128xf32> to vector<32x128xf32>
    %35 = arith.addf %33, %34 : vector<32x128xf32>
    %36 = vector.extract_strided_slice %19 {offsets = [0, 0], sizes = [24, 128], strides = [1, 1]} : vector<48x128xf32> to vector<24x128xf32>
    %37 = vector.extract_strided_slice %36 {offsets = [0, 0], sizes = [16, 128], strides = [1, 1]} : vector<24x128xf32> to vector<16x128xf32>
    %cst_21 = arith.constant dense<0.000000e+00> : vector<24x16xf32>
    %38 = tpu.matmul %36, %37, %cst_21 {dimension_numbers = #tpu.dot_dimension_numbers<[1], [1], [0], [0], [0, 0, 1, 0], [], []>} : vector<24x128xf32>, vector<16x128xf32>, vector<24x16xf32> -> vector<24x16xf32>
    %39 = vector.broadcast %0 : f32 to vector<24x16xf32>
    %40 = arith.mulf %39, %38 : vector<24x16xf32>
    %cst_22 = arith.constant dense<0xFF800000> : vector<24xf32>
    %41 = vector.multi_reduction <maximumf>, %40, %cst_22 [1] : vector<24x16xf32> to vector<24xf32>
    %42 = vector.shape_cast %41 : vector<24xf32> to vector<24x1xf32>
    %43 = vector.broadcast %42 : vector<24x1xf32> to vector<24x16xf32>
    %44 = arith.subf %40, %43 : vector<24x16xf32>
    %45 = math.exp %44 : vector<24x16xf32>
    %cst_23 = arith.constant dense<0.000000e+00> : vector<24xf32>
    %46 = vector.multi_reduction <add>, %45, %cst_23 [1] : vector<24x16xf32> to vector<24xf32>
    %47 = vector.shape_cast %46 : vector<24xf32> to vector<24x1xf32>
    %48 = tpu.reciprocal %47 {approx = true} : vector<24x1xf32> -> vector<24x1xf32>
    %49 = vector.broadcast %48 : vector<24x1xf32> to vector<24x16xf32>
    %50 = arith.mulf %45, %49 : vector<24x16xf32>
    %51 = vector.extract_strided_slice %50 {offsets = [0, 0], sizes = [16, 16], strides = [1, 1]} : vector<24x16xf32> to vector<16x16xf32>
    %52 = vector.extract_strided_slice %50 {offsets = [16, 0], sizes = [8, 16], strides = [1, 1]} : vector<24x16xf32> to vector<8x16xf32>
    %53 = vector.extract_strided_slice %35 {offsets = [0, 0], sizes = [16, 128], strides = [1, 1]} : vector<32x128xf32> to vector<16x128xf32>
    %cst_24 = arith.constant dense<0.000000e+00> : vector<16x128xf32>
    %54 = tpu.matmul %51, %53, %cst_24 {dimension_numbers = #tpu.dot_dimension_numbers<[1], [0], [0], [1], [0, 0, 1, 1], [], []>} : vector<16x16xf32>, vector<16x128xf32>, vector<16x128xf32> -> vector<16x128xf32>
    %cst_25 = arith.constant dense<0.000000e+00> : vector<128xf32>
    %55 = vector.multi_reduction <add>, %54, %cst_25 [0] : vector<16x128xf32> to vector<128xf32>
    %56 = vector.shape_cast %55 : vector<128xf32> to vector<1x128xf32>
    %57 = arith.mulf %56, %56 : vector<1x128xf32>
    %cst_26 = arith.constant dense<0.000000e+00> : vector<1xf32>
    %58 = vector.multi_reduction <add>, %57, %cst_26 [1] : vector<1x128xf32> to vector<1xf32>
    %59 = vector.shape_cast %58 : vector<1xf32> to vector<1x1xf32>
    %60 = math.rsqrt %59 : vector<1x1xf32>
    %61 = vector.broadcast %60 : vector<1x1xf32> to vector<1x128xf32>
    %62 = arith.mulf %56, %61 : vector<1x128xf32>
    %cst_27 = arith.constant dense<0.000000e+00> : vector<8x128xf32>
    %63 = tpu.matmul %52, %54, %cst_27 {dimension_numbers = #tpu.dot_dimension_numbers<[1], [0], [0], [1], [0, 0, 1, 1], [], []>} : vector<8x16xf32>, vector<16x128xf32>, vector<8x128xf32> -> vector<8x128xf32>
    %64 = arith.mulf %63, %63 : vector<8x128xf32>
    %cst_28 = arith.constant dense<0.000000e+00> : vector<8xf32>
    %65 = vector.multi_reduction <add>, %64, %cst_28 [1] : vector<8x128xf32> to vector<8xf32>
    %66 = vector.shape_cast %65 : vector<8xf32> to vector<8x1xf32>
    %67 = math.rsqrt %66 : vector<8x1xf32>
    %68 = vector.broadcast %67 : vector<8x1xf32> to vector<8x128xf32>
    %69 = arith.mulf %63, %68 : vector<8x128xf32>
    %c0_29 = arith.constant 0 : index
    %c0_30 = arith.constant 0 : index
    %c0_31 = arith.constant 0 : index
    %70 = vector.load %arg5[%c0_29, %c0_30, %c0_31] : memref<2x16x128xf32, #tpu.memory_space<vmem>>, vector<1x16x128xf32>
    %71 = vector.shape_cast %70 : vector<1x16x128xf32> to vector<16x128xf32>
    %72 = vector.shape_cast %54 : vector<16x128xf32> to vector<1x16x128xf32>
    tpu.vector_store %arg5[%c0_29, %c0_30, %c0_31], %72 {strides = array<i32>} : memref<2x16x128xf32, #tpu.memory_space<vmem>>, vector<1x16x128xf32>,
    %73 = vector.shape_cast %62 : vector<1x128xf32> to vector<1x128xf32>
    %74 = vector.broadcast %73 : vector<1x128xf32> to vector<8x128xf32>
    %c0_32 = arith.constant 0 : index
    %c0_33 = arith.constant 0 : index
    %c0_34 = arith.constant 0 : index
    %75 = vector.load %arg6[%c0_32, %c0_33, %c0_34] : memref<2x8x128xf32, #tpu.memory_space<vmem>>, vector<1x8x128xf32>
    %76 = vector.shape_cast %75 : vector<1x8x128xf32> to vector<8x128xf32>
    %77 = vector.shape_cast %74 : vector<8x128xf32> to vector<1x8x128xf32>
    tpu.vector_store %arg6[%c0_32, %c0_33, %c0_34], %77 {strides = array<i32>} : memref<2x8x128xf32, #tpu.memory_space<vmem>>, vector<1x8x128xf32>,
    %c0_35 = arith.constant 0 : index
    %c0_36 = arith.constant 0 : index
    %c0_37 = arith.constant 0 : index
    %78 = vector.load %arg7[%c0_35, %c0_36, %c0_37] : memref<2x8x128xf32, #tpu.memory_space<vmem>>, vector<1x8x128xf32>
    %79 = vector.shape_cast %78 : vector<1x8x128xf32> to vector<8x128xf32>
    %80 = vector.shape_cast %69 : vector<8x128xf32> to vector<1x8x128xf32>
    tpu.vector_store %arg7[%c0_35, %c0_36, %c0_37], %80 {strides = array<i32>} : memref<2x8x128xf32, #tpu.memory_space<vmem>>, vector<1x8x128xf32>,
    %81 = vector.extract_strided_slice %19 {offsets = [24, 0], sizes = [24, 128], strides = [1, 1]} : vector<48x128xf32> to vector<24x128xf32>
    %82 = vector.extract_strided_slice %81 {offsets = [0, 0], sizes = [16, 128], strides = [1, 1]} : vector<24x128xf32> to vector<16x128xf32>
    %cst_38 = arith.constant dense<0.000000e+00> : vector<24x16xf32>
    %83 = tpu.matmul %81, %82, %cst_38 {dimension_numbers = #tpu.dot_dimension_numbers<[1], [1], [0], [0], [0, 0, 1, 0], [], []>} : vector<24x128xf32>, vector<16x128xf32>, vector<24x16xf32> -> vector<24x16xf32>
    %84 = vector.broadcast %0 : f32 to vector<24x16xf32>
    %85 = arith.mulf %84, %83 : vector<24x16xf32>
    %cst_39 = arith.constant dense<0xFF800000> : vector<24xf32>
    %86 = vector.multi_reduction <maximumf>, %85, %cst_39 [1] : vector<24x16xf32> to vector<24xf32>
    %87 = vector.shape_cast %86 : vector<24xf32> to vector<24x1xf32>
    %88 = vector.broadcast %87 : vector<24x1xf32> to vector<24x16xf32>
    %89 = arith.subf %85, %88 : vector<24x16xf32>
    %90 = math.exp %89 : vector<24x16xf32>
    %cst_40 = arith.constant dense<0.000000e+00> : vector<24xf32>
    %91 = vector.multi_reduction <add>, %90, %cst_40 [1] : vector<24x16xf32> to vector<24xf32>
    %92 = vector.shape_cast %91 : vector<24xf32> to vector<24x1xf32>
    %93 = tpu.reciprocal %92 {approx = true} : vector<24x1xf32> -> vector<24x1xf32>
    %94 = vector.broadcast %93 : vector<24x1xf32> to vector<24x16xf32>
    %95 = arith.mulf %90, %94 : vector<24x16xf32>
    %96 = vector.extract_strided_slice %95 {offsets = [0, 0], sizes = [16, 16], strides = [1, 1]} : vector<24x16xf32> to vector<16x16xf32>
    %97 = vector.extract_strided_slice %95 {offsets = [16, 0], sizes = [8, 16], strides = [1, 1]} : vector<24x16xf32> to vector<8x16xf32>
    %98 = vector.extract_strided_slice %35 {offsets = [16, 0], sizes = [16, 128], strides = [1, 1]} : vector<32x128xf32> to vector<16x128xf32>
    %cst_41 = arith.constant dense<0.000000e+00> : vector<16x128xf32>
    %99 = tpu.matmul %96, %98, %cst_41 {dimension_numbers = #tpu.dot_dimension_numbers<[1], [0], [0], [1], [0, 0, 1, 1], [], []>} : vector<16x16xf32>, vector<16x128xf32>, vector<16x128xf32> -> vector<16x128xf32>
    %cst_42 = arith.constant dense<0.000000e+00> : vector<128xf32>
    %100 = vector.multi_reduction <add>, %99, %cst_42 [0] : vector<16x128xf32> to vector<128xf32>
    %101 = vector.shape_cast %100 : vector<128xf32> to vector<1x128xf32>
    %102 = arith.mulf %101, %101 : vector<1x128xf32>
    %cst_43 = arith.constant dense<0.000000e+00> : vector<1xf32>
    %103 = vector.multi_reduction <add>, %102, %cst_43 [1] : vector<1x128xf32> to vector<1xf32>
    %104 = vector.shape_cast %103 : vector<1xf32> to vector<1x1xf32>
    %105 = math.rsqrt %104 : vector<1x1xf32>
    %106 = vector.broadcast %105 : vector<1x1xf32> to vector<1x128xf32>
    %107 = arith.mulf %101, %106 : vector<1x128xf32>
    %cst_44 = arith.constant dense<0.000000e+00> : vector<8x128xf32>
    %108 = tpu.matmul %97, %99, %cst_44 {dimension_numbers = #tpu.dot_dimension_numbers<[1], [0], [0], [1], [0, 0, 1, 1], [], []>} : vector<8x16xf32>, vector<16x128xf32>, vector<8x128xf32> -> vector<8x128xf32>
    %109 = arith.mulf %108, %108 : vector<8x128xf32>
    %cst_45 = arith.constant dense<0.000000e+00> : vector<8xf32>
    %110 = vector.multi_reduction <add>, %109, %cst_45 [1] : vector<8x128xf32> to vector<8xf32>
    %111 = vector.shape_cast %110 : vector<8xf32> to vector<8x1xf32>
    %112 = math.rsqrt %111 : vector<8x1xf32>
    %113 = vector.broadcast %112 : vector<8x1xf32> to vector<8x128xf32>
    %114 = arith.mulf %108, %113 : vector<8x128xf32>
    %c1 = arith.constant 1 : index
    %c0_46 = arith.constant 0 : index
    %c0_47 = arith.constant 0 : index
    %115 = vector.load %arg5[%c1, %c0_46, %c0_47] : memref<2x16x128xf32, #tpu.memory_space<vmem>>, vector<1x16x128xf32>
    %116 = vector.shape_cast %115 : vector<1x16x128xf32> to vector<16x128xf32>
    %117 = vector.shape_cast %99 : vector<16x128xf32> to vector<1x16x128xf32>
    tpu.vector_store %arg5[%c1, %c0_46, %c0_47], %117 {strides = array<i32>} : memref<2x16x128xf32, #tpu.memory_space<vmem>>, vector<1x16x128xf32>,
    %118 = vector.shape_cast %107 : vector<1x128xf32> to vector<1x128xf32>
    %119 = vector.broadcast %118 : vector<1x128xf32> to vector<8x128xf32>
    %c1_48 = arith.constant 1 : index
    %c0_49 = arith.constant 0 : index
    %c0_50 = arith.constant 0 : index
    %120 = vector.load %arg6[%c1_48, %c0_49, %c0_50] : memref<2x8x128xf32, #tpu.memory_space<vmem>>, vector<1x8x128xf32>
    %121 = vector.shape_cast %120 : vector<1x8x128xf32> to vector<8x128xf32>
    %122 = vector.shape_cast %119 : vector<8x128xf32> to vector<1x8x128xf32>
    tpu.vector_store %arg6[%c1_48, %c0_49, %c0_50], %122 {strides = array<i32>} : memref<2x8x128xf32, #tpu.memory_space<vmem>>, vector<1x8x128xf32>,
    %c1_51 = arith.constant 1 : index
    %c0_52 = arith.constant 0 : index
    %c0_53 = arith.constant 0 : index
    %123 = vector.load %arg7[%c1_51, %c0_52, %c0_53] : memref<2x8x128xf32, #tpu.memory_space<vmem>>, vector<1x8x128xf32>
    %124 = vector.shape_cast %123 : vector<1x8x128xf32> to vector<8x128xf32>
    %125 = vector.shape_cast %114 : vector<8x128xf32> to vector<1x8x128xf32>
    tpu.vector_store %arg7[%c1_51, %c0_52, %c0_53], %125 {strides = array<i32>} : memref<2x8x128xf32, #tpu.memory_space<vmem>>, vector<1x8x128xf32>,
    return
  }
}

</mosaic_0001>

<llo_original>
// kernel: tpu_custom_call.1
$region0: #{tpu_custom_call.1}
  #allocation0 [shape = 'u32[]', space=smem, size = 0x4, offset = 0x4, fixed_abs, tag = 'smem constant byte address 0x4 - core index']
  #allocation1 [shape = 'u32[144,128]{1,0:T(1,128)}', space=vmem, size = 0x12000, scoped, tag = 'internal scratch']
  #allocation2 [shape = 'f32[1]{0:T(128)S(6)}', space=smem, size = 0x200, scoped, tag = 'scoped memory for tpu_custom_call.1']
  %s0 = inlined_call_operand.<no memory space> [shape: f32[1], index: 0, kind: input, shape index: {}]
  %s1 = inlined_call_operand.vmem [shape: f32[32,8], index: 1, kind: input, shape index: {}]
  %s2 = inlined_call_operand.vmem [shape: f32[16,8], index: 2, kind: input, shape index: {}]
  %s3 = inlined_call_operand.vmem [shape: f32[32,8], index: 3, kind: input, shape index: {}]
  %s4 = inlined_call_operand.hbm [shape: f32[296,128], index: 4, kind: input, shape index: {}]
  %s5 = inlined_call_operand.hbm [shape: f32[2,16,128], index: 5, kind: output, shape index: {0}]
  %s6 = inlined_call_operand.hbm [shape: f32[2,8,128], index: 6, kind: output, shape index: {1}]
  %s7 = inlined_call_operand.hbm [shape: f32[2,8,128], index: 7, kind: output, shape index: {2}]
  %8 = xla_tuple %s5, %s6, %s7
  %s9 = sld [smem:[#allocation0]]
  $region50: #{tpu_custom_call.1} parent=0
    _
  %s11 = ssub.s32 1, %s9
  %s12 = scalar_select 0, %s11, %s9
  %13 = sst [smem:[#allocation2]] %s0
  $region1: #{tpu_custom_call.1} parent=0
    #allocation3 [shape = 'u8[151552]{0}', space=vmem, size = 0x25000, scoped, tag = 'input window, operand 4, single buffered']
    #allocation4 [shape = 's32[1]{0}', space=sflag, size = 0x4, scoped, tag = 'scoped memory for tpu_custom_call.1']
    #allocation5 [shape = 's32[1]{0}', space=sflag, size = 0x4, scoped, tag = 'scoped memory for tpu_custom_call.1']
    #allocation6 [shape = 'u8[16384]{0}', space=vmem, size = 0x4000, scoped, tag = 'output window, operand 0, single buffered']
    #allocation7 [shape = 'u8[8192]{0}', space=vmem, size = 0x2000, scoped, tag = 'output window, operand 1, single buffered']
    #allocation8 [shape = 's32[1]{0}', space=sflag, size = 0x4, scoped, tag = 'scoped memory for tpu_custom_call.1']
    #allocation9 [shape = 'u8[8192]{0}', space=vmem, size = 0x2000, scoped, tag = 'output window, operand 2, single buffered']
    %14 = vsyncpa [#allocation4], 0
    %15 = vsyncpa [#allocation5], 0
    %16 = vsyncpa [#allocation8], 0
    // Predicated region
    $region2: #{tpu_custom_call.1} parent=1 // pred_check
      _
    $region3: #{tpu_custom_call.1} parent=1 // pred_check_branch
      %18 = sbr.rel (0) target = $region5
    $region4: #{tpu_custom_call.1} parent=1 // pred_region
      _
    $region5: #{tpu_custom_call.1} parent=1 // pred_fallthru
      _
    // Predicated region
    $region6: #{tpu_custom_call.1} parent=1 // pred_check
      _
    $region7: #{tpu_custom_call.1} parent=1 // pred_check_branch
      %20 = sbr.rel (0) target = $region9
    $region8: #{tpu_custom_call.1} parent=1 // pred_region
      _
    $region9: #{tpu_custom_call.1} parent=1 // pred_fallthru
      _
    // Predicated region
    $region10: #{tpu_custom_call.1} parent=1 // pred_check
      _
    $region11: #{tpu_custom_call.1} parent=1 // pred_check_branch
      %22 = sbr.rel (0) target = $region13
    $region12: #{tpu_custom_call.1} parent=1 // pred_region
      _
    $region13: #{tpu_custom_call.1} parent=1 // pred_fallthru
      _
    // Predicated region
    $region14: #{tpu_custom_call.1} parent=1 // pred_check
      _
    $region15: #{tpu_custom_call.1} parent=1 // pred_check_branch
      %24 = sbr.rel (0) target = $region17
    $region16: #{tpu_custom_call.1} parent=1 // pred_region
      _
    $region17: #{tpu_custom_call.1} parent=1 // pred_fallthru
      _
    // Predicated region
    $region18: #{tpu_custom_call.1} parent=1 // pred_check
      _
    $region19: #{tpu_custom_call.1} parent=1 // pred_check_branch
      %26 = sbr.rel (0) target = $region21
    $region20: #{tpu_custom_call.1} parent=1 // pred_region
      %s28 = ssub.s32 4736, 4736
      %29 = vsyncadd [#allocation4], %s28
      %s30 = sshll.u32 [#allocation3], 4
      %s31 = int_to_ptr.vmem [resolvable:$true] %s30
      %36 = dma.hbm_to_vmem [thread:$0]  %s4, 4736, %s31, [#allocation4], 128, 128, 8
    $region21: #{tpu_custom_call.1} parent=1 // pred_fallthru
      _
    // Predicated region
    $region22: #{tpu_custom_call.1} parent=1 // pred_check
      _
    $region23: #{tpu_custom_call.1} parent=1 // pred_check_branch
      %38 = sbr.rel (0) target = $region25
    $region24: #{tpu_custom_call.1} parent=1 // pred_region
      %39 = dma.done [#allocation4], 4736
    $region25: #{tpu_custom_call.1} parent=1 // pred_fallthru
      _
    %s40 = sld [smem:[#allocation2]]
    %v41 = vld [vmem:[#allocation3] sm:$0xff]
    %v42 = vld [vmem:[#allocation3 + $0x8] sm:$0xff]
    %v43 = vld [vmem:[#allocation3 + $0x10] sm:$0xff]
    %v44 = vld [vmem:[#allocation3 + $0xa0] sm:$0xff]
    %v45 = vld [vmem:[#allocation3 + $0xa8] sm:$0xff]
    %v46 = vld [vmem:[#allocation3 + $0xb0] sm:$0xff]
    %v47 = vld [vmem:[#allocation3 + $0xb8] sm:$0xff]
    %v48 = vld [vmem:[#allocation3 + $0xc0] sm:$0xff]
    %v49 = vld [vmem:[#allocation3 + $0xc8] sm:$0xff]
    %v50 = vld [vmem:[#allocation3 + $0xd0] sm:$0xff]
    %v51 = vld [vmem:[#allocation3 + $0xd8] sm:$0xff]
    %v52 = vld [vmem:[#allocation3 + $0xe0] sm:$0xff]
    %v53 = vld [vmem:[#allocation3 + $0xe8] sm:$0xff]
    %v54 = vld [vmem:[#allocation3 + $0xf0] sm:$0xff]
    %v55 = vld [vmem:[#allocation3 + $0xf8] sm:$0xff]
    %v56 = vld [vmem:[#allocation3 + $0x100] sm:$0xff]
    %v57 = vld [vmem:[#allocation3 + $0x108] sm:$0xff]
    %v58 = vld [vmem:[#allocation3 + $0x110] sm:$0xff]
    %v59 = vld [vmem:[#allocation3 + $0x118] sm:$0xff]
    %v60 = vld [vmem:[#allocation3 + $0x120] sm:$0x1]
    %v61 = vld [vmem:[%s1] sm:$0xff]
    %v62 = vld [vmem:[%s1 + $0x8] sm:$0xff]
    %v63 = vld [vmem:[%s1 + $0x10] sm:$0xff]
    %v64 = vld [vmem:[%s1 + $0x18] sm:$0xff]
    %v65 = vld [vmem:[%s2] sm:$0xff]
    %v66 = vld [vmem:[%s2 + $0x8] sm:$0xff]
    %vm67 = vcmask 64512
    %v69 = vsel %vm67, %v61, 0
    %v72 = vsel %vm67, %v62, 0
    %v75 = vsel %vm67, %v65, 0
    %v78 = vsel %vm67, %v63, 0
    %v81 = vsel %vm67, %v64, 0
    %v84 = vsel %vm67, %v66, 0
    %86 = vmatprep.subr.mxu0 0.0
    %87 = vmatpush1.msra.mxu0 %v41
    %88 = vmatprep.subr.mxu0 0.0
    %89 = vmatpush1.msra.mxu0 0.0
    %90 = vmatprep.subr.mxu0 0.0
    %91 = vmatpush1.msra.mxu0 0.0
    %92 = vmatprep.subr.mxu0 0.0
    %93 = vmatpush1.msra.mxu0 0.0
    %94 = vmatprep.subr.mxu0 0.0
    %95 = vmatpush1.msra.mxu0 0.0
    %96 = vmatprep.subr.mxu0 0.0
    %97 = vmatpush1.msra.mxu0 0.0
    %98 = vmatprep.subr.mxu0 0.0
    %99 = vmatpush1.msra.mxu0 0.0
    %100 = vmatprep.subr.mxu0 0.0
    %101 = vmatpush1.msra.mxu0 0.0
    %102 = vmatprep.subr.mxu0 0.0
    %103 = vmatpush1.msra.mxu0 0.0
    %104 = vmatprep.subr.mxu0 0.0
    %105 = vmatpush1.msra.mxu0 0.0
    %106 = vmatprep.subr.mxu0 0.0
    %107 = vmatpush1.msra.mxu0 0.0
    %108 = vmatprep.subr.mxu0 0.0
    %109 = vmatpush1.msra.mxu0 0.0
    %110 = vmatprep.subr.mxu0 0.0
    %111 = vmatpush1.msra.mxu0 0.0
    %112 = vmatprep.subr.mxu0 0.0
    %113 = vmatpush1.msra.mxu0 0.0
    %114 = vmatprep.subr.mxu0 0.0
    %115 = vmatpush1.msra.mxu0 0.0
    %116 = vmatprep.subr.mxu0 0.0
    %117 = vmatpush1.msra.mxu0 0.0
    %118 = vmatprep.subr.mxu0 0.0
    %119 = vmatpush1.msra.mxu0 0.0
    %120 = vmatprep.subr.mxu0 0.0
    %121 = vmatpush1.msra.mxu0 0.0
    %122 = vmatprep.subr.mxu0 0.0
    %123 = vmatpush1.msra.mxu0 0.0
    %124 = vmatprep.subr.mxu0 0.0
    %125 = vmatpush1.msra.mxu0 0.0
    %126 = vmatprep.subr.mxu0 0.0
    %127 = vmatpush1.msra.mxu0 0.0
    %128 = vmatprep.subr.mxu0 0.0
    %129 = vmatpush1.msra.mxu0 0.0
    %130 = vmatprep.subr.mxu0 0.0
    %131 = vmatpush1.msra.mxu0 0.0
    %132 = vmatprep.subr.mxu0 0.0
    %133 = vmatpush1.msra.mxu0 0.0
    %134 = vmatprep.subr.mxu0 0.0
    %135 = vmatpush1.msra.mxu0 0.0
    %136 = vmatprep.subr.mxu0 0.0
    %137 = vmatpush1.msra.mxu0 0.0
    %138 = vmatprep.subr.mxu0 0.0
    %139 = vmatpush1.msra.mxu0 0.0
    %140 = vmatprep.subr.mxu0 0.0
    %141 = vmatpush1.msra.mxu0 0.0
    %142 = vmatprep.subr.mxu0 0.0
    %143 = vmatpush1.msra.mxu0 0.0
    %144 = vmatprep.subr.mxu0 0.0
    %145 = vmatpush1.msra.mxu0 0.0
    %146 = vmatprep.subr.mxu0 0.0
    %147 = vmatpush1.msra.mxu0 0.0
    %148 = vmatprep.subr.mxu0 0.0
    %149 = vmatpush1.msra.mxu0 0.0
    %150 = vmatprep.mubr.f32.mxu0 0.0
    %151 = vmatmul.mubr.f32.gmra.mrb[0].mxu0 %v69
    %v152 = vpop.f32.mrb[0].mxu0
    %v153 = vadd.f32 0.0, %v152
    %v154 = vpop.f32.mrb[0].mxu0
    %155 = vmatprep.mubr.f32.mxu0 0.0
    %156 = vmatmul.mubr.f32.gmra.mrb[0].mxu0 %v72
    %v157 = vpop.f32.mrb[0].mxu0
    %v158 = vadd.f32 0.0, %v157
    %v159 = vpop.f32.mrb[0].mxu0
    %160 = vmatprep.mubr.f32.mxu0 0.0
    %161 = vmatmul.mubr.f32.gmra.mrb[0].mxu0 %v75
    %v162 = vpop.f32.mrb[0].mxu0
    %v163 = vadd.f32 0.0, %v162
    %v164 = vpop.f32.mrb[0].mxu0
    %165 = vmatprep.mubr.f32.mxu0 0.0
    %166 = vmatmul.mubr.f32.gmra.mrb[0].mxu0 %v78
    %v167 = vpop.f32.mrb[0].mxu0
    %v168 = vadd.f32 0.0, %v167
    %v169 = vpop.f32.mrb[0].mxu0
    %170 = vmatprep.mubr.f32.mxu0 0.0
    %171 = vmatmul.mubr.f32.gmra.mrb[0].mxu0 %v81
    %v172 = vpop.f32.mrb[0].mxu0
    %v173 = vadd.f32 0.0, %v172
    %v174 = vpop.f32.mrb[0].mxu0
    %175 = vmatprep.mubr.f32.mxu0 0.0
    %176 = vmatmul.mubr.f32.gmra.mrb[0].mxu0 %v84
    %v177 = vpop.f32.mrb[0].mxu0
    %v178 = vadd.f32 0.0, %v177
    %v179 = vpop.f32.mrb[0].mxu0
    %180 = vdwg.mxu0
    %v181 = vmul.f32 %v153, %v153
    %v182 = vmul.f32 %v158, %v158
    %v183 = vmul.f32 %v163, %v163
    %v184 = vmul.f32 %v168, %v168
    %v185 = vmul.f32 %v173, %v173
    %v186 = vmul.f32 %v178, %v178
    %187 = vadd.xlane.f32.xlu0 %v181
    %v188 = vpop.xlane.xlu0 %187
    %189 = vadd.xlane.f32.xlu0 %v182
    %v190 = vpop.xlane.xlu0 %189
    %191 = vadd.xlane.f32.xlu0 %v183
    %v192 = vpop.xlane.xlu0 %191
    %193 = vadd.xlane.f32.xlu0 %v184
    %v194 = vpop.xlane.xlu0 %193
    %195 = vadd.xlane.f32.xlu0 %v185
    %v196 = vpop.xlane.xlu0 %195
    %197 = vadd.xlane.f32.xlu0 %v186
    %v198 = vpop.xlane.xlu0 %197
    %v199 = vrsqrt.pop %v188
    %v200 = vrsqrt.pop %v190
    %v201 = vrsqrt.pop %v192
    %v202 = vrsqrt.pop %v194
    %v203 = vrsqrt.pop %v196
    %v204 = vrsqrt.pop %v198
    %v205 = vmul.f32 %v153, %v199
    %v206 = vmul.f32 %v158, %v200
    %v207 = vmul.f32 %v163, %v201
    %v208 = vmul.f32 %v168, %v202
    %v209 = vmul.f32 %v173, %v203
    %v210 = vmul.f32 %v178, %v204
    %v211 = vld [vmem:[%s3] sm:$0xff]
    %v212 = vld [vmem:[%s3 + $0x8] sm:$0xff]
    %v213 = vld [vmem:[%s3 + $0x10] sm:$0xff]
    %v214 = vld [vmem:[%s3 + $0x18] sm:$0xff]
    %v216 = vsel %vm67, %v211, 0
    %v219 = vsel %vm67, %v212, 0
    %v222 = vsel %vm67, %v213, 0
    %v225 = vsel %vm67, %v214, 0
    %227 = vmatprep.subr.mxu0 0.0
    %228 = vmatpush1.msra.mxu0 %v43
    %229 = vmatprep.subr.mxu0 0.0
    %230 = vmatpush1.msra.mxu0 0.0
    %231 = vmatprep.subr.mxu0 0.0
    %232 = vmatpush1.msra.mxu0 0.0
    %233 = vmatprep.subr.mxu0 0.0
    %234 = vmatpush1.msra.mxu0 0.0
    %235 = vmatprep.subr.mxu0 0.0
    %236 = vmatpush1.msra.mxu0 0.0
    %237 = vmatprep.subr.mxu0 0.0
    %238 = vmatpush1.msra.mxu0 0.0
    %239 = vmatprep.subr.mxu0 0.0
    %240 = vmatpush1.msra.mxu0 0.0
    %241 = vmatprep.subr.mxu0 0.0
    %242 = vmatpush1.msra.mxu0 0.0
    %243 = vmatprep.subr.mxu0 0.0
    %244 = vmatpush1.msra.mxu0 0.0
    %245 = vmatprep.subr.mxu0 0.0
    %246 = vmatpush1.msra.mxu0 0.0
    %247 = vmatprep.subr.mxu0 0.0
    %248 = vmatpush1.msra.mxu0 0.0
    %249 = vmatprep.subr.mxu0 0.0
    %250 = vmatpush1.msra.mxu0 0.0
    %251 = vmatprep.subr.mxu0 0.0
    %252 = vmatpush1.msra.mxu0 0.0
    %253 = vmatprep.subr.mxu0 0.0
    %254 = vmatpush1.msra.mxu0 0.0
    %255 = vmatprep.subr.mxu0 0.0
    %256 = vmatpush1.msra.mxu0 0.0
    %257 = vmatprep.subr.mxu0 0.0
    %258 = vmatpush1.msra.mxu0 0.0
    %259 = vmatprep.subr.mxu0 0.0
    %260 = vmatpush1.msra.mxu0 0.0
    %261 = vmatprep.subr.mxu0 0.0
    %262 = vmatpush1.msra.mxu0 0.0
    %263 = vmatprep.subr.mxu0 0.0
    %264 = vmatpush1.msra.mxu0 0.0
    %265 = vmatprep.subr.mxu0 0.0
    %266 = vmatpush1.msra.mxu0 0.0
    %267 = vmatprep.subr.mxu0 0.0
    %268 = vmatpush1.msra.mxu0 0.0
    %269 = vmatprep.subr.mxu0 0.0
    %270 = vmatpush1.msra.mxu0 0.0
    %271 = vmatprep.subr.mxu0 0.0
    %272 = vmatpush1.msra.mxu0 0.0
    %273 = vmatprep.subr.mxu0 0.0
    %274 = vmatpush1.msra.mxu0 0.0
    %275 = vmatprep.subr.mxu0 0.0
    %276 = vmatpush1.msra.mxu0 0.0
    %277 = vmatprep.subr.mxu0 0.0
    %278 = vmatpush1.msra.mxu0 0.0
    %279 = vmatprep.subr.mxu0 0.0
    %280 = vmatpush1.msra.mxu0 0.0
    %281 = vmatprep.subr.mxu0 0.0
    %282 = vmatpush1.msra.mxu0 0.0
    %283 = vmatprep.subr.mxu0 0.0
    %284 = vmatpush1.msra.mxu0 0.0
    %285 = vmatprep.subr.mxu0 0.0
    %286 = vmatpush1.msra.mxu0 0.0
    %287 = vmatprep.subr.mxu0 0.0
    %288 = vmatpush1.msra.mxu0 0.0
    %289 = vmatprep.subr.mxu0 0.0
    %290 = vmatpush1.msra.mxu0 0.0
    %291 = vmatprep.mubr.f32.mxu0 0.0
    %292 = vmatmul.mubr.f32.gmra.mrb[0].mxu0 %v216
    %v293 = vpop.f32.mrb[0].mxu0
    %v294 = vadd.f32 0.0, %v293
    %v295 = vpop.f32.mrb[0].mxu0
    %296 = vmatprep.mubr.f32.mxu0 0.0
    %297 = vmatmul.mubr.f32.gmra.mrb[0].mxu0 %v219
    %v298 = vpop.f32.mrb[0].mxu0
    %v299 = vadd.f32 0.0, %v298
    %v300 = vpop.f32.mrb[0].mxu0
    %301 = vmatprep.mubr.f32.mxu0 0.0
    %302 = vmatmul.mubr.f32.gmra.mrb[0].mxu0 %v222
    %v303 = vpop.f32.mrb[0].mxu0
    %v304 = vadd.f32 0.0, %v303
    %v305 = vpop.f32.mrb[0].mxu0
    %306 = vmatprep.mubr.f32.mxu0 0.0
    %307 = vmatmul.mubr.f32.gmra.mrb[0].mxu0 %v225
    %v308 = vpop.f32.mrb[0].mxu0
    %v309 = vadd.f32 0.0, %v308
    %v310 = vpop.f32.mrb[0].mxu0
    %311 = vdwg.mxu0
    %312 = vmatprep.subr.mxu0 0.0
    %313 = vmatpush1.msra.mxu0 %v42
    %314 = vmatprep.subr.mxu0 0.0
    %315 = vmatpush1.msra.mxu0 0.0
    %316 = vmatprep.subr.mxu0 0.0
    %317 = vmatpush1.msra.mxu0 0.0
    %318 = vmatprep.subr.mxu0 0.0
    %319 = vmatpush1.msra.mxu0 0.0
    %320 = vmatprep.subr.mxu0 0.0
    %321 = vmatpush1.msra.mxu0 0.0
    %322 = vmatprep.subr.mxu0 0.0
    %323 = vmatpush1.msra.mxu0 0.0
    %324 = vmatprep.subr.mxu0 0.0
    %325 = vmatpush1.msra.mxu0 0.0
    %326 = vmatprep.subr.mxu0 0.0
    %327 = vmatpush1.msra.mxu0 0.0
    %328 = vmatprep.subr.mxu0 0.0
    %329 = vmatpush1.msra.mxu0 0.0
    %330 = vmatprep.subr.mxu0 0.0
    %331 = vmatpush1.msra.mxu0 0.0
    %332 = vmatprep.subr.mxu0 0.0
    %333 = vmatpush1.msra.mxu0 0.0
    %334 = vmatprep.subr.mxu0 0.0
    %335 = vmatpush1.msra.mxu0 0.0
    %336 = vmatprep.subr.mxu0 0.0
    %337 = vmatpush1.msra.mxu0 0.0
    %338 = vmatprep.subr.mxu0 0.0
    %339 = vmatpush1.msra.mxu0 0.0
    %340 = vmatprep.subr.mxu0 0.0
    %341 = vmatpush1.msra.mxu0 0.0
    %342 = vmatprep.subr.mxu0 0.0
    %343 = vmatpush1.msra.mxu0 0.0
    %344 = vmatprep.subr.mxu0 0.0
    %345 = vmatpush1.msra.mxu0 0.0
    %346 = vmatprep.subr.mxu0 0.0
    %347 = vmatpush1.msra.mxu0 0.0
    %348 = vmatprep.subr.mxu0 0.0
    %349 = vmatpush1.msra.mxu0 0.0
    %350 = vmatprep.subr.mxu0 0.0
    %351 = vmatpush1.msra.mxu0 0.0
    %352 = vmatprep.subr.mxu0 0.0
    %353 = vmatpush1.msra.mxu0 0.0
    %354 = vmatprep.subr.mxu0 0.0
    %355 = vmatpush1.msra.mxu0 0.0
    %356 = vmatprep.subr.mxu0 0.0
    %357 = vmatpush1.msra.mxu0 0.0
    %358 = vmatprep.subr.mxu0 0.0
    %359 = vmatpush1.msra.mxu0 0.0
    %360 = vmatprep.subr.mxu0 0.0
    %361 = vmatpush1.msra.mxu0 0.0
    %362 = vmatprep.subr.mxu0 0.0
    %363 = vmatpush1.msra.mxu0 0.0
    %364 = vmatprep.subr.mxu0 0.0
    %365 = vmatpush1.msra.mxu0 0.0
    %366 = vmatprep.subr.mxu0 0.0
    %367 = vmatpush1.msra.mxu0 0.0
    %368 = vmatprep.subr.mxu0 0.0
    %369 = vmatpush1.msra.mxu0 0.0
    %370 = vmatprep.subr.mxu0 0.0
    %371 = vmatpush1.msra.mxu0 0.0
    %372 = vmatprep.subr.mxu0 0.0
    %373 = vmatpush1.msra.mxu0 0.0
    %374 = vmatprep.subr.mxu0 0.0
    %375 = vmatpush1.msra.mxu0 0.0
    %376 = vmatprep.mubr.f32.mxu0 0.0
    %377 = vmatmul.mubr.f32.gmra.mrb[0].mxu0 %v69
    %v378 = vpop.f32.mrb[0].mxu0
    %v379 = vadd.f32 %v294, %v378
    %v380 = vpop.f32.mrb[0].mxu0
    %381 = vmatprep.mubr.f32.mxu0 0.0
    %382 = vmatmul.mubr.f32.gmra.mrb[0].mxu0 %v72
    %v383 = vpop.f32.mrb[0].mxu0
    %v384 = vadd.f32 %v299, %v383
    %v385 = vpop.f32.mrb[0].mxu0
    %386 = vmatprep.mubr.f32.mxu0 0.0
    %387 = vmatmul.mubr.f32.gmra.mrb[0].mxu0 %v78
    %v388 = vpop.f32.mrb[0].mxu0
    %v389 = vadd.f32 %v304, %v388
    %v390 = vpop.f32.mrb[0].mxu0
    %391 = vmatprep.mubr.f32.mxu0 0.0
    %392 = vmatmul.mubr.f32.gmra.mrb[0].mxu0 %v81
    %v393 = vpop.f32.mrb[0].mxu0
    %v394 = vadd.f32 %v309, %v393
    %v395 = vpop.f32.mrb[0].mxu0
    %396 = vdwg.mxu0
    %v397 = vmax.f32 %v379, 0.0
    %v398 = vmax.f32 %v384, 0.0
    %v399 = vmax.f32 %v389, 0.0
    %v400 = vmax.f32 %v394, 0.0
    %v401 = vld [vmem:[#allocation3 + $0x18] sm:$0xff]
    %v402 = vld [vmem:[#allocation3 + $0x20] sm:$0xff]
    %v403 = vld [vmem:[#allocation3 + $0x28] sm:$0xff]
    %v404 = vld [vmem:[#allocation3 + $0x30] sm:$0xff]
    %v405 = vld [vmem:[#allocation3 + $0x38] sm:$0xff]
    %v406 = vld [vmem:[#allocation3 + $0x40] sm:$0xff]
    %v407 = vld [vmem:[#allocation3 + $0x48] sm:$0xff]
    %v408 = vld [vmem:[#allocation3 + $0x50] sm:$0xff]
    %v409 = vld [vmem:[#allocation3 + $0x58] sm:$0xff]
    %v410 = vld [vmem:[#allocation3 + $0x60] sm:$0xff]
    %v411 = vld [vmem:[#allocation3 + $0x68] sm:$0xff]
    %v412 = vld [vmem:[#allocation3 + $0x70] sm:$0xff]
    %v413 = vld [vmem:[#allocation3 + $0x78] sm:$0xff]
    %v414 = vld [vmem:[#allocation3 + $0x80] sm:$0xff]
    %v415 = vld [vmem:[#allocation3 + $0x88] sm:$0xff]
    %v416 = vld [vmem:[#allocation3 + $0x90] sm:$0xff]
    %v417 = vld [vmem:[#allocation3 + $0x98] sm:$0x1]
    %v418 = vlaneseq
    %v419 = vshrl.u32 %v418, 7
    %v420 = vsub.s32 0, %v419
    %v421 = vrot.slane %v417, %v420
    %422 = vmatprep.subr.mxu0 0.0
    %423 = vmatpush1.msra.mxu0 %v401
    %424 = vmatprep.subr.mxu0 0.0
    %425 = vmatpush1.msra.mxu0 %v402
    %426 = vmatprep.subr.mxu0 0.0
    %427 = vmatpush1.msra.mxu0 %v403
    %428 = vmatprep.subr.mxu0 0.0
    %429 = vmatpush1.msra.mxu0 %v404
    %430 = vmatprep.subr.mxu0 0.0
    %431 = vmatpush1.msra.mxu0 %v405
    %432 = vmatprep.subr.mxu0 0.0
    %433 = vmatpush1.msra.mxu0 %v406
    %434 = vmatprep.subr.mxu0 0.0
    %435 = vmatpush1.msra.mxu0 %v407
    %436 = vmatprep.subr.mxu0 0.0
    %437 = vmatpush1.msra.mxu0 %v408
    %438 = vmatprep.subr.mxu0 0.0
    %439 = vmatpush1.msra.mxu0 %v409
    %440 = vmatprep.subr.mxu0 0.0
    %441 = vmatpush1.msra.mxu0 %v410
    %442 = vmatprep.subr.mxu0 0.0
    %443 = vmatpush1.msra.mxu0 %v411
    %444 = vmatprep.subr.mxu0 0.0
    %445 = vmatpush1.msra.mxu0 %v412
    %446 = vmatprep.subr.mxu0 0.0
    %447 = vmatpush1.msra.mxu0 %v413
    %448 = vmatprep.subr.mxu0 0.0
    %449 = vmatpush1.msra.mxu0 %v414
    %450 = vmatprep.subr.mxu0 0.0
    %451 = vmatpush1.msra.mxu0 %v415
    %452 = vmatprep.subr.mxu0 0.0
    %453 = vmatpush1.msra.mxu0 %v416
    %454 = vmatprep.subr.mxu0 0.0
    %455 = vmatpush1.msra.mxu0 0.0
    %456 = vmatprep.subr.mxu0 0.0
    %457 = vmatpush1.msra.mxu0 0.0
    %458 = vmatprep.subr.mxu0 0.0
    %459 = vmatpush1.msra.mxu0 0.0
    %460 = vmatprep.subr.mxu0 0.0
    %461 = vmatpush1.msra.mxu0 0.0
    %462 = vmatprep.subr.mxu0 0.0
    %463 = vmatpush1.msra.mxu0 0.0
    %464 = vmatprep.subr.mxu0 0.0
    %465 = vmatpush1.msra.mxu0 0.0
    %466 = vmatprep.subr.mxu0 0.0
    %467 = vmatpush1.msra.mxu0 0.0
    %468 = vmatprep.subr.mxu0 0.0
    %469 = vmatpush1.msra.mxu0 0.0
    %470 = vmatprep.subr.mxu0 0.0
    %471 = vmatpush1.msra.mxu0 0.0
    %472 = vmatprep.subr.mxu0 0.0
    %473 = vmatpush1.msra.mxu0 0.0
    %474 = vmatprep.subr.mxu0 0.0
    %475 = vmatpush1.msra.mxu0 0.0
    %476 = vmatprep.subr.mxu0 0.0
    %477 = vmatpush1.msra.mxu0 0.0
    %478 = vmatprep.subr.mxu0 0.0
    %479 = vmatpush1.msra.mxu0 0.0
    %480 = vmatprep.subr.mxu0 0.0
    %481 = vmatpush1.msra.mxu0 0.0
    %482 = vmatprep.subr.mxu0 0.0
    %483 = vmatpush1.msra.mxu0 0.0
    %484 = vmatprep.subr.mxu0 0.0
    %485 = vmatpush1.msra.mxu0 0.0
    %486 = vmatprep.mubr.f32.mxu0 0.0
    %487 = vmatmul.mubr.f32.gmra.mrb[0].mxu0 %v397
    %v488 = vpop.f32.mrb[0].mxu0
    %v489 = vadd.f32 %v421, %v488
    %v490 = vpop.f32.mrb[0].mxu0
    %491 = vmatprep.mubr.f32.mxu0 0.0
    %492 = vmatmul.mubr.f32.gmra.mrb[0].mxu0 %v398
    %v493 = vpop.f32.mrb[0].mxu0
    %v494 = vadd.f32 %v421, %v493
    %v495 = vpop.f32.mrb[0].mxu0
    %496 = vmatprep.mubr.f32.mxu0 0.0
    %497 = vmatmul.mubr.f32.gmra.mrb[0].mxu0 %v399
    %v498 = vpop.f32.mrb[0].mxu0
    %v499 = vadd.f32 %v421, %v498
    %v500 = vpop.f32.mrb[0].mxu0
    %501 = vmatprep.mubr.f32.mxu0 0.0
    %502 = vmatmul.mubr.f32.gmra.mrb[0].mxu0 %v400
    %v503 = vpop.f32.mrb[0].mxu0
    %v504 = vadd.f32 %v421, %v503
    %v505 = vpop.f32.mrb[0].mxu0
    %506 = vdwg.mxu0
    %v507 = vmax.f32 %v489, 0.0
    %v508 = vmax.f32 %v494, 0.0
    %v509 = vmax.f32 %v499, 0.0
    %v510 = vmax.f32 %v504, 0.0
    %v511 = vlaneseq
    %v512 = vshrl.u32 %v511, 7
    %v513 = vsub.s32 0, %v512
    %v514 = vrot.slane %v60, %v513
    %515 = vmatprep.subr.mxu0 0.0
    %516 = vmatpush1.msra.mxu0 %v44
    %517 = vmatprep.subr.mxu0 0.0
    %518 = vmatpush1.msra.mxu0 %v45
    %519 = vmatprep.subr.mxu0 0.0
    %520 = vmatpush1.msra.mxu0 %v46
    %521 = vmatprep.subr.mxu0 0.0
    %522 = vmatpush1.msra.mxu0 %v47
    %523 = vmatprep.subr.mxu0 0.0
    %524 = vmatpush1.msra.mxu0 %v48
    %525 = vmatprep.subr.mxu0 0.0
    %526 = vmatpush1.msra.mxu0 %v49
    %527 = vmatprep.subr.mxu0 0.0
    %528 = vmatpush1.msra.mxu0 %v50
    %529 = vmatprep.subr.mxu0 0.0
    %530 = vmatpush1.msra.mxu0 %v51
    %531 = vmatprep.subr.mxu0 0.0
    %532 = vmatpush1.msra.mxu0 %v52
    %533 = vmatprep.subr.mxu0 0.0
    %534 = vmatpush1.msra.mxu0 %v53
    %535 = vmatprep.subr.mxu0 0.0
    %536 = vmatpush1.msra.mxu0 %v54
    %537 = vmatprep.subr.mxu0 0.0
    %538 = vmatpush1.msra.mxu0 %v55
    %539 = vmatprep.subr.mxu0 0.0
    %540 = vmatpush1.msra.mxu0 %v56
    %541 = vmatprep.subr.mxu0 0.0
    %542 = vmatpush1.msra.mxu0 %v57
    %543 = vmatprep.subr.mxu0 0.0
    %544 = vmatpush1.msra.mxu0 %v58
    %545 = vmatprep.subr.mxu0 0.0
    %546 = vmatpush1.msra.mxu0 %v59
    %547 = vmatprep.subr.mxu0 0.0
    %548 = vmatpush1.msra.mxu0 0.0
    %549 = vmatprep.subr.mxu0 0.0
    %550 = vmatpush1.msra.mxu0 0.0
    %551 = vmatprep.subr.mxu0 0.0
    %552 = vmatpush1.msra.mxu0 0.0
    %553 = vmatprep.subr.mxu0 0.0
    %554 = vmatpush1.msra.mxu0 0.0
    %555 = vmatprep.subr.mxu0 0.0
    %556 = vmatpush1.msra.mxu0 0.0
    %557 = vmatprep.subr.mxu0 0.0
    %558 = vmatpush1.msra.mxu0 0.0
    %559 = vmatprep.subr.mxu0 0.0
    %560 = vmatpush1.msra.mxu0 0.0
    %561 = vmatprep.subr.mxu0 0.0
    %562 = vmatpush1.msra.mxu0 0.0
    %563 = vmatprep.subr.mxu0 0.0
    %564 = vmatpush1.msra.mxu0 0.0
    %565 = vmatprep.subr.mxu0 0.0
    %566 = vmatpush1.msra.mxu0 0.0
    %567 = vmatprep.subr.mxu0 0.0
    %568 = vmatpush1.msra.mxu0 0.0
    %569 = vmatprep.subr.mxu0 0.0
    %570 = vmatpush1.msra.mxu0 0.0
    %571 = vmatprep.subr.mxu0 0.0
    %572 = vmatpush1.msra.mxu0 0.0
    %573 = vmatprep.subr.mxu0 0.0
    %574 = vmatpush1.msra.mxu0 0.0
    %575 = vmatprep.subr.mxu0 0.0
    %576 = vmatpush1.msra.mxu0 0.0
    %577 = vmatprep.subr.mxu0 0.0
    %578 = vmatpush1.msra.mxu0 0.0
    %579 = vmatprep.mubr.f32.mxu0 0.0
    %580 = vmatmul.mubr.f32.gmra.mrb[0].mxu0 %v507
    %v581 = vpop.f32.mrb[0].mxu0
    %v582 = vadd.f32 %v514, %v581
    %v583 = vpop.f32.mrb[0].mxu0
    %584 = vmatprep.mubr.f32.mxu0 0.0
    %585 = vmatmul.mubr.f32.gmra.mrb[0].mxu0 %v508
    %v586 = vpop.f32.mrb[0].mxu0
    %v587 = vadd.f32 %v514, %v586
    %v588 = vpop.f32.mrb[0].mxu0
    %589 = vmatprep.mubr.f32.mxu0 0.0
    %590 = vmatmul.mubr.f32.gmra.mrb[0].mxu0 %v509
    %v591 = vpop.f32.mrb[0].mxu0
    %v592 = vadd.f32 %v514, %v591
    %v593 = vpop.f32.mrb[0].mxu0
    %594 = vmatprep.mubr.f32.mxu0 0.0
    %595 = vmatmul.mubr.f32.gmra.mrb[0].mxu0 %v510
    %v596 = vpop.f32.mrb[0].mxu0
    %v597 = vadd.f32 %v514, %v596
    %v598 = vpop.f32.mrb[0].mxu0
    %599 = vdwg.mxu0
    %600 = vmatprep.subr.mxu0 0.0
    %601 = vmatpush1.xpose.msra.mxu0 %v205
    %602 = vmatprep.subr.mxu0 0.0
    %603 = vmatpush1.xpose.msra.mxu0 %v206
    %604 = vmatprep.subr.mxu0 0.0
    %605 = vmatpush1.xpose.msra.mxu0 0.0
    %606 = vmatprep.subr.mxu0 0.0
    %607 = vmatpush1.xpose.msra.mxu0 0.0
    %608 = vmatprep.subr.mxu0 0.0
    %609 = vmatpush1.xpose.msra.mxu0 0.0
    %610 = vmatprep.subr.mxu0 0.0
    %611 = vmatpush1.xpose.msra.mxu0 0.0
    %612 = vmatprep.subr.mxu0 0.0
    %613 = vmatpush1.xpose.msra.mxu0 0.0
    %614 = vmatprep.subr.mxu0 0.0
    %615 = vmatpush1.xpose.msra.mxu0 0.0
    %616 = vmatprep.subr.mxu0 0.0
    %617 = vmatpush1.xpose.msra.mxu0 0.0
    %618 = vmatprep.subr.mxu0 0.0
    %619 = vmatpush1.xpose.msra.mxu0 0.0
    %620 = vmatprep.subr.mxu0 0.0
    %621 = vmatpush1.xpose.msra.mxu0 0.0
    %622 = vmatprep.subr.mxu0 0.0
    %623 = vmatpush1.xpose.msra.mxu0 0.0
    %624 = vmatprep.subr.mxu0 0.0
    %625 = vmatpush1.xpose.msra.mxu0 0.0
    %626 = vmatprep.subr.mxu0 0.0
    %627 = vmatpush1.xpose.msra.mxu0 0.0
    %628 = vmatprep.subr.mxu0 0.0
    %629 = vmatpush1.xpose.msra.mxu0 0.0
    %630 = vmatprep.subr.mxu0 0.0
    %631 = vmatpush1.xpose.msra.mxu0 0.0
    %632 = vmatprep.subr.mxu0 0.0
    %633 = vmatpush1.xpose.msra.mxu0 0.0
    %634 = vmatprep.subr.mxu0 0.0
    %635 = vmatpush1.xpose.msra.mxu0 0.0
    %636 = vmatprep.subr.mxu0 0.0
    %637 = vmatpush1.xpose.msra.mxu0 0.0
    %638 = vmatprep.subr.mxu0 0.0
    %639 = vmatpush1.xpose.msra.mxu0 0.0
    %640 = vmatprep.subr.mxu0 0.0
    %641 = vmatpush1.xpose.msra.mxu0 0.0
    %642 = vmatprep.subr.mxu0 0.0
    %643 = vmatpush1.xpose.msra.mxu0 0.0
    %644 = vmatprep.subr.mxu0 0.0
    %645 = vmatpush1.xpose.msra.mxu0 0.0
    %646 = vmatprep.subr.mxu0 0.0
    %647 = vmatpush1.xpose.msra.mxu0 0.0
    %648 = vmatprep.subr.mxu0 0.0
    %649 = vmatpush1.xpose.msra.mxu0 0.0
    %650 = vmatprep.subr.mxu0 0.0
    %651 = vmatpush1.xpose.msra.mxu0 0.0
    %652 = vmatprep.subr.mxu0 0.0
    %653 = vmatpush1.xpose.msra.mxu0 0.0
    %654 = vmatprep.subr.mxu0 0.0
    %655 = vmatpush1.xpose.msra.mxu0 0.0
    %656 = vmatprep.subr.mxu0 0.0
    %657 = vmatpush1.xpose.msra.mxu0 0.0
    %658 = vmatprep.subr.mxu0 0.0
    %659 = vmatpush1.xpose.msra.mxu0 0.0
    %660 = vmatprep.subr.mxu0 0.0
    %661 = vmatpush1.xpose.msra.mxu0 0.0
    %662 = vmatprep.subr.mxu0 0.0
    %663 = vmatpush1.xpose.msra.mxu0 0.0
    %664 = vmatprep.mubr.f32.mxu0 0.0
    %665 = vmatmul.mubr.f32.gmra.mrb[0].mxu0 %v205
    %v666 = vpop.f32.mrb[0].mxu0
    %v667 = vadd.f32 0.0, %v666
    %v668 = vpop.f32.mrb[0].mxu0
    %669 = vmatprep.mubr.f32.mxu0 0.0
    %670 = vmatmul.mubr.f32.gmra.mrb[0].mxu0 %v206
    %v671 = vpop.f32.mrb[0].mxu0
    %v672 = vadd.f32 0.0, %v671
    %v673 = vpop.f32.mrb[0].mxu0
    %674 = vmatprep.mubr.f32.mxu0 0.0
    %675 = vmatmul.mubr.f32.gmra.mrb[0].mxu0 %v207
    %v676 = vpop.f32.mrb[0].mxu0
    %v677 = vadd.f32 0.0, %v676
    %v678 = vpop.f32.mrb[0].mxu0
    %679 = vdwg.mxu0
    %v680 = vstv %s40
    %v681 = vmul.f32 %v680, %v667
    %v682 = vmul.f32 %v680, %v672
    %v683 = vmul.f32 %v680, %v677
    %vm684 = vcmask 130048
    %v685 = vsel %vm684, %v681, -inf
    %686 = vmax.xlane.f32.xlu0 %v685
    %v687 = vpop.xlane.xlu0 %686
    %v688 = vsel %vm684, %v682, -inf
    %689 = vmax.xlane.f32.xlu0 %v688
    %v690 = vpop.xlane.xlu0 %689
    %v691 = vsel %vm684, %v683, -inf
    %692 = vmax.xlane.f32.xlu0 %v691
    %v693 = vpop.xlane.xlu0 %692
    %v694 = vsub.f32 %v681, %v687
    %v695 = vsub.f32 %v682, %v690
    %v696 = vsub.f32 %v683, %v693
    %v697 = vmul.f32 %v694, 1.442695
    %v698 = vpow.pop %v697
    %v699 = vmul.f32 %v695, 1.442695
    %v700 = vpow.pop %v699
    %v701 = vmul.f32 %v696, 1.442695
    %v702 = vpow.pop %v701
    %v703 = vsel %vm684, %v698, 0.0
    %704 = vadd.xlane.f32.xlu0 %v703
    %v705 = vpop.xlane.xlu0 %704
    %v706 = vsel %vm684, %v700, 0.0
    %707 = vadd.xlane.f32.xlu0 %v706
    %v708 = vpop.xlane.xlu0 %707
    %v709 = vsel %vm684, %v702, 0.0
    %710 = vadd.xlane.f32.xlu0 %v709
    %v711 = vpop.xlane.xlu0 %710
    %v712 = vrcp.pop %v705
    %v713 = vrcp.pop %v708
    %v714 = vrcp.pop %v711
    %v715 = vmul.f32 %v698, %v712
    %v716 = vmul.f32 %v700, %v713
    %v717 = vmul.f32 %v702, %v714
    %v719 = vsel %vm684, %v715, 0
    %v722 = vsel %vm684, %v716, 0
    %724 = vmatprep.subr.mxu0 0.0
    %725 = vmatpush1.msra.mxu0 %v582
    %726 = vmatprep.subr.mxu0 0.0
    %727 = vmatpush1.msra.mxu0 %v587
    %728 = vmatprep.subr.mxu0 0.0
    %729 = vmatpush1.msra.mxu0 0.0
    %730 = vmatprep.subr.mxu0 0.0
    %731 = vmatpush1.msra.mxu0 0.0
    %732 = vmatprep.subr.mxu0 0.0
    %733 = vmatpush1.msra.mxu0 0.0
    %734 = vmatprep.subr.mxu0 0.0
    %735 = vmatpush1.msra.mxu0 0.0
    %736 = vmatprep.subr.mxu0 0.0
    %737 = vmatpush1.msra.mxu0 0.0
    %738 = vmatprep.subr.mxu0 0.0
    %739 = vmatpush1.msra.mxu0 0.0
    %740 = vmatprep.subr.mxu0 0.0
    %741 = vmatpush1.msra.mxu0 0.0
    %742 = vmatprep.subr.mxu0 0.0
    %743 = vmatpush1.msra.mxu0 0.0
    %744 = vmatprep.subr.mxu0 0.0
    %745 = vmatpush1.msra.mxu0 0.0
    %746 = vmatprep.subr.mxu0 0.0
    %747 = vmatpush1.msra.mxu0 0.0
    %748 = vmatprep.subr.mxu0 0.0
    %749 = vmatpush1.msra.mxu0 0.0
    %750 = vmatprep.subr.mxu0 0.0
    %751 = vmatpush1.msra.mxu0 0.0
    %752 = vmatprep.subr.mxu0 0.0
    %753 = vmatpush1.msra.mxu0 0.0
    %754 = vmatprep.subr.mxu0 0.0
    %755 = vmatpush1.msra.mxu0 0.0
    %756 = vmatprep.subr.mxu0 0.0
    %757 = vmatpush1.msra.mxu0 0.0
    %758 = vmatprep.subr.mxu0 0.0
    %759 = vmatpush1.msra.mxu0 0.0
    %760 = vmatprep.subr.mxu0 0.0
    %761 = vmatpush1.msra.mxu0 0.0
    %762 = vmatprep.subr.mxu0 0.0
    %763 = vmatpush1.msra.mxu0 0.0
    %764 = vmatprep.subr.mxu0 0.0
    %765 = vmatpush1.msra.mxu0 0.0
    %766 = vmatprep.subr.mxu0 0.0
    %767 = vmatpush1.msra.mxu0 0.0
    %768 = vmatprep.subr.mxu0 0.0
    %769 = vmatpush1.msra.mxu0 0.0
    %770 = vmatprep.subr.mxu0 0.0
    %771 = vmatpush1.msra.mxu0 0.0
    %772 = vmatprep.subr.mxu0 0.0
    %773 = vmatpush1.msra.mxu0 0.0
    %774 = vmatprep.subr.mxu0 0.0
    %775 = vmatpush1.msra.mxu0 0.0
    %776 = vmatprep.subr.mxu0 0.0
    %777 = vmatpush1.msra.mxu0 0.0
    %778 = vmatprep.subr.mxu0 0.0
    %779 = vmatpush1.msra.mxu0 0.0
    %780 = vmatprep.subr.mxu0 0.0
    %781 = vmatpush1.msra.mxu0 0.0
    %782 = vmatprep.subr.mxu0 0.0
    %783 = vmatpush1.msra.mxu0 0.0
    %784 = vmatprep.subr.mxu0 0.0
    %785 = vmatpush1.msra.mxu0 0.0
    %786 = vmatprep.subr.mxu0 0.0
    %787 = vmatpush1.msra.mxu0 0.0
    %788 = vmatprep.mubr.f32.mxu0 0.0
    %789 = vmatmul.mubr.f32.gmra.mrb[0].mxu0 %v719
    %v790 = vpop.f32.mrb[0].mxu0
    %v791 = vadd.f32 0.0, %v790
    %v792 = vpop.f32.mrb[0].mxu0
    %793 = vmatprep.mubr.f32.mxu0 0.0
    %794 = vmatmul.mubr.f32.gmra.mrb[0].mxu0 %v722
    %v795 = vpop.f32.mrb[0].mxu0
    %v796 = vadd.f32 0.0, %v795
    %v797 = vpop.f32.mrb[0].mxu0
    %798 = vdwg.mxu0
    %v799 = vadd.f32 %v791, %v796
    %v800 = vrot.slane %v799, 4
    %v801 = vadd.f32 %v799, %v800
    %v802 = vrot.slane %v801, 2
    %v803 = vadd.f32 %v801, %v802
    %v804 = vrot.slane %v803, 1
    %v805 = vadd.f32 %v803, %v804
    %v806 = vmul.f32 %v805, %v805
    %807 = vadd.xlane.f32.xlu0 %v806
    %v808 = vpop.xlane.xlu0 %807
    %v809 = vrsqrt.pop %v808
    %v810 = vmul.f32 %v805, %v809
    %v812 = vsel %vm684, %v717, 0
    %814 = vmatprep.subr.mxu0 0.0
    %815 = vmatpush1.msra.mxu0 %v791
    %816 = vmatprep.subr.mxu0 0.0
    %817 = vmatpush1.msra.mxu0 %v796
    %818 = vmatprep.subr.mxu0 0.0
    %819 = vmatpush1.msra.mxu0 0.0
    %820 = vmatprep.subr.mxu0 0.0
    %821 = vmatpush1.msra.mxu0 0.0
    %822 = vmatprep.subr.mxu0 0.0
    %823 = vmatpush1.msra.mxu0 0.0
    %824 = vmatprep.subr.mxu0 0.0
    %825 = vmatpush1.msra.mxu0 0.0
    %826 = vmatprep.subr.mxu0 0.0
    %827 = vmatpush1.msra.mxu0 0.0
    %828 = vmatprep.subr.mxu0 0.0
    %829 = vmatpush1.msra.mxu0 0.0
    %830 = vmatprep.subr.mxu0 0.0
    %831 = vmatpush1.msra.mxu0 0.0
    %832 = vmatprep.subr.mxu0 0.0
    %833 = vmatpush1.msra.mxu0 0.0
    %834 = vmatprep.subr.mxu0 0.0
    %835 = vmatpush1.msra.mxu0 0.0
    %836 = vmatprep.subr.mxu0 0.0
    %837 = vmatpush1.msra.mxu0 0.0
    %838 = vmatprep.subr.mxu0 0.0
    %839 = vmatpush1.msra.mxu0 0.0
    %840 = vmatprep.subr.mxu0 0.0
    %841 = vmatpush1.msra.mxu0 0.0
    %842 = vmatprep.subr.mxu0 0.0
    %843 = vmatpush1.msra.mxu0 0.0
    %844 = vmatprep.subr.mxu0 0.0
    %845 = vmatpush1.msra.mxu0 0.0
    %846 = vmatprep.subr.mxu0 0.0
    %847 = vmatpush1.msra.mxu0 0.0
    %848 = vmatprep.subr.mxu0 0.0
    %849 = vmatpush1.msra.mxu0 0.0
    %850 = vmatprep.subr.mxu0 0.0
    %851 = vmatpush1.msra.mxu0 0.0
    %852 = vmatprep.subr.mxu0 0.0
    %853 = vmatpush1.msra.mxu0 0.0
    %854 = vmatprep.subr.mxu0 0.0
    %855 = vmatpush1.msra.mxu0 0.0
    %856 = vmatprep.subr.mxu0 0.0
    %857 = vmatpush1.msra.mxu0 0.0
    %858 = vmatprep.subr.mxu0 0.0
    %859 = vmatpush1.msra.mxu0 0.0
    %860 = vmatprep.subr.mxu0 0.0
    %861 = vmatpush1.msra.mxu0 0.0
    %862 = vmatprep.subr.mxu0 0.0
    %863 = vmatpush1.msra.mxu0 0.0
    %864 = vmatprep.subr.mxu0 0.0
    %865 = vmatpush1.msra.mxu0 0.0
    %866 = vmatprep.subr.mxu0 0.0
    %867 = vmatpush1.msra.mxu0 0.0
    %868 = vmatprep.subr.mxu0 0.0
    %869 = vmatpush1.msra.mxu0 0.0
    %870 = vmatprep.subr.mxu0 0.0
    %871 = vmatpush1.msra.mxu0 0.0
    %872 = vmatprep.subr.mxu0 0.0
    %873 = vmatpush1.msra.mxu0 0.0
    %874 = vmatprep.subr.mxu0 0.0
    %875 = vmatpush1.msra.mxu0 0.0
    %876 = vmatprep.subr.mxu0 0.0
    %877 = vmatpush1.msra.mxu0 0.0
    %878 = vmatprep.mubr.f32.mxu0 0.0
    %879 = vmatmul.mubr.f32.gmra.mrb[0].mxu0 %v812
    %v880 = vpop.f32.mrb[0].mxu0
    %v881 = vadd.f32 0.0, %v880
    %v882 = vpop.f32.mrb[0].mxu0
    %883 = vdwg.mxu0
    %v884 = vmul.f32 %v881, %v881
    %885 = vadd.xlane.f32.xlu0 %v884
    %v886 = vpop.xlane.xlu0 %885
    %v887 = vrsqrt.pop %v886
    %v888 = vmul.f32 %v881, %v887
    %889 = vst [vmem:[#allocation6] sm:$0xff] %v791
    %890 = vst [vmem:[#allocation6 + $0x8] sm:$0xff] %v796
    %891 = vst [vmem:[#allocation7] sm:$0xff] %v810
    %892 = vst [vmem:[#allocation9] sm:$0xff] %v888
    %893 = vmatprep.subr.mxu0 0.0
    %894 = vmatpush1.xpose.msra.mxu0 %v208
    %895 = vmatprep.subr.mxu0 0.0
    %896 = vmatpush1.xpose.msra.mxu0 %v209
    %897 = vmatprep.subr.mxu0 0.0
    %898 = vmatpush1.xpose.msra.mxu0 0.0
    %899 = vmatprep.subr.mxu0 0.0
    %900 = vmatpush1.xpose.msra.mxu0 0.0
    %901 = vmatprep.subr.mxu0 0.0
    %902 = vmatpush1.xpose.msra.mxu0 0.0
    %903 = vmatprep.subr.mxu0 0.0
    %904 = vmatpush1.xpose.msra.mxu0 0.0
    %905 = vmatprep.subr.mxu0 0.0
    %906 = vmatpush1.xpose.msra.mxu0 0.0
    %907 = vmatprep.subr.mxu0 0.0
    %908 = vmatpush1.xpose.msra.mxu0 0.0
    %909 = vmatprep.subr.mxu0 0.0
    %910 = vmatpush1.xpose.msra.mxu0 0.0
    %911 = vmatprep.subr.mxu0 0.0
    %912 = vmatpush1.xpose.msra.mxu0 0.0
    %913 = vmatprep.subr.mxu0 0.0
    %914 = vmatpush1.xpose.msra.mxu0 0.0
    %915 = vmatprep.subr.mxu0 0.0
    %916 = vmatpush1.xpose.msra.mxu0 0.0
    %917 = vmatprep.subr.mxu0 0.0
    %918 = vmatpush1.xpose.msra.mxu0 0.0
    %919 = vmatprep.subr.mxu0 0.0
    %920 = vmatpush1.xpose.msra.mxu0 0.0
    %921 = vmatprep.subr.mxu0 0.0
    %922 = vmatpush1.xpose.msra.mxu0 0.0
    %923 = vmatprep.subr.mxu0 0.0
    %924 = vmatpush1.xpose.msra.mxu0 0.0
    %925 = vmatprep.subr.mxu0 0.0
    %926 = vmatpush1.xpose.msra.mxu0 0.0
    %927 = vmatprep.subr.mxu0 0.0
    %928 = vmatpush1.xpose.msra.mxu0 0.0
    %929 = vmatprep.subr.mxu0 0.0
    %930 = vmatpush1.xpose.msra.mxu0 0.0
    %931 = vmatprep.subr.mxu0 0.0
    %932 = vmatpush1.xpose.msra.mxu0 0.0
    %933 = vmatprep.subr.mxu0 0.0
    %934 = vmatpush1.xpose.msra.mxu0 0.0
    %935 = vmatprep.subr.mxu0 0.0
    %936 = vmatpush1.xpose.msra.mxu0 0.0
    %937 = vmatprep.subr.mxu0 0.0
    %938 = vmatpush1.xpose.msra.mxu0 0.0
    %939 = vmatprep.subr.mxu0 0.0
    %940 = vmatpush1.xpose.msra.mxu0 0.0
    %941 = vmatprep.subr.mxu0 0.0
    %942 = vmatpush1.xpose.msra.mxu0 0.0
    %943 = vmatprep.subr.mxu0 0.0
    %944 = vmatpush1.xpose.msra.mxu0 0.0
    %945 = vmatprep.subr.mxu0 0.0
    %946 = vmatpush1.xpose.msra.mxu0 0.0
    %947 = vmatprep.subr.mxu0 0.0
    %948 = vmatpush1.xpose.msra.mxu0 0.0
    %949 = vmatprep.subr.mxu0 0.0
    %950 = vmatpush1.xpose.msra.mxu0 0.0
    %951 = vmatprep.subr.mxu0 0.0
    %952 = vmatpush1.xpose.msra.mxu0 0.0
    %953 = vmatprep.subr.mxu0 0.0
    %954 = vmatpush1.xpose.msra.mxu0 0.0
    %955 = vmatprep.subr.mxu0 0.0
    %956 = vmatpush1.xpose.msra.mxu0 0.0
    %957 = vmatprep.mubr.f32.mxu0 0.0
    %958 = vmatmul.mubr.f32.gmra.mrb[0].mxu0 %v208
    %v959 = vpop.f32.mrb[0].mxu0
    %v960 = vadd.f32 0.0, %v959
    %v961 = vpop.f32.mrb[0].mxu0
    %962 = vmatprep.mubr.f32.mxu0 0.0
    %963 = vmatmul.mubr.f32.gmra.mrb[0].mxu0 %v209
    %v964 = vpop.f32.mrb[0].mxu0
    %v965 = vadd.f32 0.0, %v964
    %v966 = vpop.f32.mrb[0].mxu0
    %967 = vmatprep.mubr.f32.mxu0 0.0
    %968 = vmatmul.mubr.f32.gmra.mrb[0].mxu0 %v210
    %v969 = vpop.f32.mrb[0].mxu0
    %v970 = vadd.f32 0.0, %v969
    %v971 = vpop.f32.mrb[0].mxu0
    %972 = vdwg.mxu0
    %v973 = vmul.f32 %v680, %v960
    %v974 = vmul.f32 %v680, %v965
    %v975 = vmul.f32 %v680, %v970
    %v976 = vsel %vm684, %v973, -inf
    %977 = vmax.xlane.f32.xlu0 %v976
    %v978 = vpop.xlane.xlu0 %977
    %v979 = vsel %vm684, %v974, -inf
    %980 = vmax.xlane.f32.xlu0 %v979
    %v981 = vpop.xlane.xlu0 %980
    %v982 = vsel %vm684, %v975, -inf
    %983 = vmax.xlane.f32.xlu0 %v982
    %v984 = vpop.xlane.xlu0 %983
    %v985 = vsub.f32 %v973, %v978
    %v986 = vsub.f32 %v974, %v981
    %v987 = vsub.f32 %v975, %v984
    %v988 = vmul.f32 %v985, 1.442695
    %v989 = vpow.pop %v988
    %v990 = vmul.f32 %v986, 1.442695
    %v991 = vpow.pop %v990
    %v992 = vmul.f32 %v987, 1.442695
    %v993 = vpow.pop %v992
    %v994 = vsel %vm684, %v989, 0.0
    %995 = vadd.xlane.f32.xlu0 %v994
    %v996 = vpop.xlane.xlu0 %995
    %v997 = vsel %vm684, %v991, 0.0
    %998 = vadd.xlane.f32.xlu0 %v997
    %v999 = vpop.xlane.xlu0 %998
    %v1000 = vsel %vm684, %v993, 0.0
    %1001 = vadd.xlane.f32.xlu0 %v1000
    %v1002 = vpop.xlane.xlu0 %1001
    %v1003 = vrcp.pop %v996
    %v1004 = vrcp.pop %v999
    %v1005 = vrcp.pop %v1002
    %v1006 = vmul.f32 %v989, %v1003
    %v1007 = vmul.f32 %v991, %v1004
    %v1008 = vmul.f32 %v993, %v1005
    %v1010 = vsel %vm684, %v1006, 0
    %v1013 = vsel %vm684, %v1007, 0
    %1015 = vmatprep.subr.mxu0 0.0
    %1016 = vmatpush1.msra.mxu0 %v592
    %1017 = vmatprep.subr.mxu0 0.0
    %1018 = vmatpush1.msra.mxu0 %v597
    %1019 = vmatprep.subr.mxu0 0.0
    %1020 = vmatpush1.msra.mxu0 0.0
    %1021 = vmatprep.subr.mxu0 0.0
    %1022 = vmatpush1.msra.mxu0 0.0
    %1023 = vmatprep.subr.mxu0 0.0
    %1024 = vmatpush1.msra.mxu0 0.0
    %1025 = vmatprep.subr.mxu0 0.0
    %1026 = vmatpush1.msra.mxu0 0.0
    %1027 = vmatprep.subr.mxu0 0.0
    %1028 = vmatpush1.msra.mxu0 0.0
    %1029 = vmatprep.subr.mxu0 0.0
    %1030 = vmatpush1.msra.mxu0 0.0
    %1031 = vmatprep.subr.mxu0 0.0
    %1032 = vmatpush1.msra.mxu0 0.0
    %1033 = vmatprep.subr.mxu0 0.0
    %1034 = vmatpush1.msra.mxu0 0.0
    %1035 = vmatprep.subr.mxu0 0.0
    %1036 = vmatpush1.msra.mxu0 0.0
    %1037 = vmatprep.subr.mxu0 0.0
    %1038 = vmatpush1.msra.mxu0 0.0
    %1039 = vmatprep.subr.mxu0 0.0
    %1040 = vmatpush1.msra.mxu0 0.0
    %1041 = vmatprep.subr.mxu0 0.0
    %1042 = vmatpush1.msra.mxu0 0.0
    %1043 = vmatprep.subr.mxu0 0.0
    %1044 = vmatpush1.msra.mxu0 0.0
    %1045 = vmatprep.subr.mxu0 0.0
    %1046 = vmatpush1.msra.mxu0 0.0
    %1047 = vmatprep.subr.mxu0 0.0
    %1048 = vmatpush1.msra.mxu0 0.0
    %1049 = vmatprep.subr.mxu0 0.0
    %1050 = vmatpush1.msra.mxu0 0.0
    %1051 = vmatprep.subr.mxu0 0.0
    %1052 = vmatpush1.msra.mxu0 0.0
    %1053 = vmatprep.subr.mxu0 0.0
    %1054 = vmatpush1.msra.mxu0 0.0
    %1055 = vmatprep.subr.mxu0 0.0
    %1056 = vmatpush1.msra.mxu0 0.0
    %1057 = vmatprep.subr.mxu0 0.0
    %1058 = vmatpush1.msra.mxu0 0.0
    %1059 = vmatprep.subr.mxu0 0.0
    %1060 = vmatpush1.msra.mxu0 0.0
    %1061 = vmatprep.subr.mxu0 0.0
    %1062 = vmatpush1.msra.mxu0 0.0
    %1063 = vmatprep.subr.mxu0 0.0
    %1064 = vmatpush1.msra.mxu0 0.0
    %1065 = vmatprep.subr.mxu0 0.0
    %1066 = vmatpush1.msra.mxu0 0.0
    %1067 = vmatprep.subr.mxu0 0.0
    %1068 = vmatpush1.msra.mxu0 0.0
    %1069 = vmatprep.subr.mxu0 0.0
    %1070 = vmatpush1.msra.mxu0 0.0
    %1071 = vmatprep.subr.mxu0 0.0
    %1072 = vmatpush1.msra.mxu0 0.0
    %1073 = vmatprep.subr.mxu0 0.0
    %1074 = vmatpush1.msra.mxu0 0.0
    %1075 = vmatprep.subr.mxu0 0.0
    %1076 = vmatpush1.msra.mxu0 0.0
    %1077 = vmatprep.subr.mxu0 0.0
    %1078 = vmatpush1.msra.mxu0 0.0
    %1079 = vmatprep.mubr.f32.mxu0 0.0
    %1080 = vmatmul.mubr.f32.gmra.mrb[0].mxu0 %v1010
    %v1081 = vpop.f32.mrb[0].mxu0
    %v1082 = vadd.f32 0.0, %v1081
    %v1083 = vpop.f32.mrb[0].mxu0
    %1084 = vmatprep.mubr.f32.mxu0 0.0
    %1085 = vmatmul.mubr.f32.gmra.mrb[0].mxu0 %v1013
    %v1086 = vpop.f32.mrb[0].mxu0
    %v1087 = vadd.f32 0.0, %v1086
    %v1088 = vpop.f32.mrb[0].mxu0
    %1089 = vdwg.mxu0
    %v1090 = vadd.f32 %v1082, %v1087
    %v1091 = vrot.slane %v1090, 4
    %v1092 = vadd.f32 %v1090, %v1091
    %v1093 = vrot.slane %v1092, 2
    %v1094 = vadd.f32 %v1092, %v1093
    %v1095 = vrot.slane %v1094, 1
    %v1096 = vadd.f32 %v1094, %v1095
    %v1097 = vmul.f32 %v1096, %v1096
    %1098 = vadd.xlane.f32.xlu0 %v1097
    %v1099 = vpop.xlane.xlu0 %1098
    %v1100 = vrsqrt.pop %v1099
    %v1101 = vmul.f32 %v1096, %v1100
    %v1103 = vsel %vm684, %v1008, 0
    %1105 = vmatprep.subr.mxu0 0.0
    %1106 = vmatpush1.msra.mxu0 %v1082
    %1107 = vmatprep.subr.mxu0 0.0
    %1108 = vmatpush1.msra.mxu0 %v1087
    %1109 = vmatprep.subr.mxu0 0.0
    %1110 = vmatpush1.msra.mxu0 0.0
    %1111 = vmatprep.subr.mxu0 0.0
    %1112 = vmatpush1.msra.mxu0 0.0
    %1113 = vmatprep.subr.mxu0 0.0
    %1114 = vmatpush1.msra.mxu0 0.0
    %1115 = vmatprep.subr.mxu0 0.0
    %1116 = vmatpush1.msra.mxu0 0.0
    %1117 = vmatprep.subr.mxu0 0.0
    %1118 = vmatpush1.msra.mxu0 0.0
    %1119 = vmatprep.subr.mxu0 0.0
    %1120 = vmatpush1.msra.mxu0 0.0
    %1121 = vmatprep.subr.mxu0 0.0
    %1122 = vmatpush1.msra.mxu0 0.0
    %1123 = vmatprep.subr.mxu0 0.0
    %1124 = vmatpush1.msra.mxu0 0.0
    %1125 = vmatprep.subr.mxu0 0.0
    %1126 = vmatpush1.msra.mxu0 0.0
    %1127 = vmatprep.subr.mxu0 0.0
    %1128 = vmatpush1.msra.mxu0 0.0
    %1129 = vmatprep.subr.mxu0 0.0
    %1130 = vmatpush1.msra.mxu0 0.0
    %1131 = vmatprep.subr.mxu0 0.0
    %1132 = vmatpush1.msra.mxu0 0.0
    %1133 = vmatprep.subr.mxu0 0.0
    %1134 = vmatpush1.msra.mxu0 0.0
    %1135 = vmatprep.subr.mxu0 0.0
    %1136 = vmatpush1.msra.mxu0 0.0
    %1137 = vmatprep.subr.mxu0 0.0
    %1138 = vmatpush1.msra.mxu0 0.0
    %1139 = vmatprep.subr.mxu0 0.0
    %1140 = vmatpush1.msra.mxu0 0.0
    %1141 = vmatprep.subr.mxu0 0.0
    %1142 = vmatpush1.msra.mxu0 0.0
    %1143 = vmatprep.subr.mxu0 0.0
    %1144 = vmatpush1.msra.mxu0 0.0
    %1145 = vmatprep.subr.mxu0 0.0
    %1146 = vmatpush1.msra.mxu0 0.0
    %1147 = vmatprep.subr.mxu0 0.0
    %1148 = vmatpush1.msra.mxu0 0.0
    %1149 = vmatprep.subr.mxu0 0.0
    %1150 = vmatpush1.msra.mxu0 0.0
    %1151 = vmatprep.subr.mxu0 0.0
    %1152 = vmatpush1.msra.mxu0 0.0
    %1153 = vmatprep.subr.mxu0 0.0
    %1154 = vmatpush1.msra.mxu0 0.0
    %1155 = vmatprep.subr.mxu0 0.0
    %1156 = vmatpush1.msra.mxu0 0.0
    %1157 = vmatprep.subr.mxu0 0.0
    %1158 = vmatpush1.msra.mxu0 0.0
    %1159 = vmatprep.subr.mxu0 0.0
    %1160 = vmatpush1.msra.mxu0 0.0
    %1161 = vmatprep.subr.mxu0 0.0
    %1162 = vmatpush1.msra.mxu0 0.0
    %1163 = vmatprep.subr.mxu0 0.0
    %1164 = vmatpush1.msra.mxu0 0.0
    %1165 = vmatprep.subr.mxu0 0.0
    %1166 = vmatpush1.msra.mxu0 0.0
    %1167 = vmatprep.subr.mxu0 0.0
    %1168 = vmatpush1.msra.mxu0 0.0
    %1169 = vmatprep.mubr.f32.mxu0 0.0
    %1170 = vmatmul.mubr.f32.gmra.mrb[0].mxu0 %v1103
    %v1171 = vpop.f32.mrb[0].mxu0
    %v1172 = vadd.f32 0.0, %v1171
    %v1173 = vpop.f32.mrb[0].mxu0
    %1174 = vdwg.mxu0
    %v1175 = vmul.f32 %v1172, %v1172
    %1176 = vadd.xlane.f32.xlu0 %v1175
    %v1177 = vpop.xlane.xlu0 %1176
    %v1178 = vrsqrt.pop %v1177
    %v1179 = vmul.f32 %v1172, %v1178
    %s1180 = scalar_lea.vmem [#allocation6], 16
    %1181 = vst [vmem:[%s1180] sm:$0xff] %v1082
    %1182 = vst [vmem:[%s1180 + $0x8] sm:$0xff] %v1087
    %s1183 = scalar_lea.vmem [#allocation7], 8
    %1184 = vst [vmem:[%s1183] sm:$0xff] %v1101
    %s1185 = scalar_lea.vmem [#allocation9], 8
    %1186 = vst [vmem:[%s1185] sm:$0xff] %v1179
    // Predicated region
    $region26: #{tpu_custom_call.1} parent=1 // pred_check
      _
    $region27: #{tpu_custom_call.1} parent=1 // pred_check_branch
      %1188 = sbr.rel (0) target = $region29
    $region28: #{tpu_custom_call.1} parent=1 // pred_region
      %s1190 = ssub.s32 512, 512
      %1191 = vsyncadd [#allocation5], %s1190
      %s1192 = sshll.u32 [#allocation6], 4
      %s1193 = int_to_ptr.vmem [resolvable:$true] %s1192
      %1198 = dma.vmem_to_hbm [thread:$0]  %s1193, 512, %s5, [#allocation5], 128, 128, 8
    $region29: #{tpu_custom_call.1} parent=1 // pred_fallthru
      _
    // Predicated region
    $region30: #{tpu_custom_call.1} parent=1 // pred_check
      _
    $region31: #{tpu_custom_call.1} parent=1 // pred_check_branch
      %1200 = sbr.rel (0) target = $region33
    $region32: #{tpu_custom_call.1} parent=1 // pred_region
      %s1202 = ssub.s32 256, 256
      %1203 = vsyncadd [#allocation8], %s1202
      %s1204 = sshll.u32 [#allocation7], 4
      %s1205 = int_to_ptr.vmem [resolvable:$true] %s1204
      %1210 = dma.vmem_to_hbm [thread:$0]  %s1205, 256, %s6, [#allocation8], 128, 128, 8
    $region33: #{tpu_custom_call.1} parent=1 // pred_fallthru
      _
    // Predicated region
    $region34: #{tpu_custom_call.1} parent=1 // pred_check
      _
    $region35: #{tpu_custom_call.1} parent=1 // pred_check_branch
      %1212 = sbr.rel (0) target = $region37
    $region36: #{tpu_custom_call.1} parent=1 // pred_region
      %s1214 = ssub.s32 256, 256
      %1215 = vsyncadd [#allocation8], %s1214
      %s1216 = sshll.u32 [#allocation9], 4
      %s1217 = int_to_ptr.vmem [resolvable:$true] %s1216
      %1222 = dma.vmem_to_hbm [thread:$0]  %s1217, 256, %s7, [#allocation8], 128, 128, 8
    $region37: #{tpu_custom_call.1} parent=1 // pred_fallthru
      _
    // Predicated region
    $region38: #{tpu_custom_call.1} parent=1 // pred_check
      _
    $region39: #{tpu_custom_call.1} parent=1 // pred_check_branch
      %1224 = sbr.rel (0) target = $region41
    $region40: #{tpu_custom_call.1} parent=1 // pred_region
      %1225 = dma.done [#allocation5], 512
    $region41: #{tpu_custom_call.1} parent=1 // pred_fallthru
      _
    // Predicated region
    $region42: #{tpu_custom_call.1} parent=1 // pred_check
      _
    $region43: #{tpu_custom_call.1} parent=1 // pred_check_branch
      %1227 = sbr.rel (0) target = $region45
    $region44: #{tpu_custom_call.1} parent=1 // pred_region
      %1228 = dma.done [#allocation8], 256
    $region45: #{tpu_custom_call.1} parent=1 // pred_fallthru
      _
    // Predicated region
    $region46: #{tpu_custom_call.1} parent=1 // pred_check
      _
    $region47: #{tpu_custom_call.1} parent=1 // pred_check_branch
      %1230 = sbr.rel (0) target = $region49
    $region48: #{tpu_custom_call.1} parent=1 // pred_region
      %1231 = dma.done [#allocation8], 256
    $region49: #{tpu_custom_call.1} parent=1 // pred_fallthru
      _
    %1232 = vsyncpa [#allocation4], 1
    %1233 = vsyncpa [#allocation5], 1
    %1234 = vsyncpa [#allocation8], 1

</llo_original>
